<compile_context>
chip_gen: v7x
topology: tpu7x:2x2x1
jax: 0.10.0
libtpu: 0.0.40
codegen_flags: <defaults>
</compile_context>

<pallas_src>
import functools

import jax
import jax.numpy as jnp
from jax import lax
from jax.experimental import pallas as pl
from jax.experimental.pallas import tpu as pltpu


# ---------------------------------------------------------------------------
# Fused kernel: Q/KV projection + per-head attention + head concat (VMEM slab)
# + output projection. One grid step per (batch element, query tile).
# ---------------------------------------------------------------------------
def _mha_fused_kernel(x_ref, wq_ref, bq_ref, wkv_ref, bkv_ref, wp_ref, bp_ref,
                      o_ref, y_ref, *, num_heads, tq, approx_recip):
    n = x_ref.shape[1]
    e = x_ref.shape[2]
    d = e // num_heads

    x_full = x_ref[0].astype(jnp.bfloat16)                       # (N, E) bf16
    if tq == n:
        xq = x_full                                              # single query tile
    else:
        q0 = pl.multiple_of(pl.program_id(1) * tq, tq)
        xq = x_ref[0, pl.ds(q0, tq), :].astype(jnp.bfloat16)     # (TQ, E) bf16

    # Q projection for this query tile; K/V projection over the full context.
    # bf16 MXU operands, f32 accumulation; bias add in f32.
    q_all = (jnp.dot(xq, wq_ref[...], preferred_element_type=jnp.float32)
             + bq_ref[...])                                      # (TQ, E) f32
    kv = (jnp.dot(x_full, wkv_ref[...], preferred_element_type=jnp.float32)
          + bkv_ref[...])                                        # (N, 2E) f32

    q_b = q_all.astype(jnp.bfloat16)
    k_b = kv[:, :e].astype(jnp.bfloat16)
    v_b = kv[:, e:].astype(jnp.bfloat16)

    for h in range(num_heads):                                   # static unroll (small H)
        q = q_b[:, h * d:(h + 1) * d]                            # (TQ, d)
        k = k_b[:, h * d:(h + 1) * d]                            # (N, d)
        v = v_b[:, h * d:(h + 1) * d]                            # (N, d)
        # energy = q @ k^T without an explicit transpose (contract last dims).
        energy = lax.dot_general(q, k, (((1,), (1,)), ((), ())),
                                 preferred_element_type=jnp.float32)   # (TQ, N) f32
        m = jnp.max(energy, axis=-1, keepdims=True)
        ex = jnp.exp(energy - m)
        s = jnp.sum(ex, axis=-1, keepdims=True)
        # softmax(-1); the post-softmax 1/sqrt(E) is folded into wp_ref.
        # att_drop (nn.Dropout) is identity at inference time.
        att = ex * pl.reciprocal(s, approx=approx_recip)         # (TQ, N) f32
        # Write this head's output straight into its lane slice of the VMEM slab
        # (bounds live ranges; no jnp.concatenate relayout).
        y_ref[:, h * d:(h + 1) * d] = jnp.dot(
            att.astype(jnp.bfloat16), v, preferred_element_type=jnp.float32)

    out = (jnp.dot(y_ref[...].astype(jnp.bfloat16), wp_ref[...],
                   preferred_element_type=jnp.float32) + bp_ref[...])   # (TQ, E)
    o_ref[0] = out.astype(o_ref.dtype)


# ---------------------------------------------------------------------------
# One-time parameter re-layout / cast (hoisted out of the per-call path).
# ---------------------------------------------------------------------------
def prepare_params(params, *, num_heads, weight_dtype=jnp.bfloat16):
    W_qkv, b_qkv, W_proj, b_proj = params
    E = W_qkv.shape[1]
    H = num_heads
    d = E // H
    inv_scaling = 1.0 / (float(E) ** 0.5)
    # rearrange 'b n (h d qkv) -> qkv b h n d' => output feature index
    # f = h*3d + 3*di + qkv (qkv innermost). Re-order the fused weight columns to
    # [Q(h0..hH-1) | K(h0..) | V(h0..)], each head d-wide, then split into a Q
    # weight (E,E) and a fused KV weight (E,2E).
    W_all = (jnp.asarray(W_qkv).T.reshape(E, H, d, 3)     # (E, H, d, 3)
             .transpose(0, 3, 1, 2)                       # (E, 3, H, d)
             .reshape(E, 3 * E))                          # column = qkv*E + h*d + di
    b_all = jnp.asarray(b_qkv).reshape(H, d, 3).transpose(2, 0, 1).reshape(3 * E)
    W_q = W_all[:, :E].astype(weight_dtype)
    W_kv = W_all[:, E:].astype(weight_dtype)
    b_q = b_all[:E].reshape(1, E).astype(jnp.float32)
    b_kv = b_all[E:].reshape(1, 2 * E).astype(jnp.float32)
    # Fold the post-softmax 1/sqrt(E) into the projection weight (free at prepare
    # time; removes a per-row scalar multiply from the hot loop).
    Wp_t = (jnp.asarray(W_proj).T * inv_scaling).astype(weight_dtype)
    bp = jnp.asarray(b_proj).reshape(1, E).astype(jnp.float32)
    return W_q, b_q, W_kv, b_kv, Wp_t, bp


def _choose_query_tile(n):
    if n <= 512:
        return n
    for tq in (512, 384, 256, 128, 64, 32, 16, 8):
        if n % tq == 0:
            return tq
    return n


def _mha_mcf_call(x, prepared, *, num_heads, approx_recip, single_buffer_weights):
    B, N, E = x.shape
    H = num_heads
    W_q, b_q, W_kv, b_kv, Wp_t, bp = prepared
    tq = _choose_query_tile(N)
    nqt = N // tq

    def const_spec(shape):
        idx = lambda b, qt: (0,) * len(shape)
        if single_buffer_weights:
            # Grid-invariant blocks: a single buffer halves their VMEM footprint.
            return pl.BlockSpec(shape, idx, pipeline_mode=pl.Buffered(1))
        return pl.BlockSpec(shape, idx)

    wbytes = ((W_q.size + W_kv.size + Wp_t.size) * W_q.dtype.itemsize
              + (b_q.size + b_kv.size + bp.size) * 4)
    flops = B * nqt * (2 * tq * E * E          # Q projection
                       + 2 * N * E * 2 * E     # K/V projection
                       + 4 * tq * N * E        # energy + att@v over all heads
                       + 2 * tq * E * E)       # output projection
    bytes_accessed = 4 * B * N * E + 4 * B * N * E + wbytes
    cost = pl.CostEstimate(flops=int(flops),
                           transcendentals=int(B * H * N * N),
                           bytes_accessed=int(bytes_accessed))

    # Rough per-step VMEM need (x/out blocks double-buffered, weights, f32
    # intermediates, scratch slab). Never ask below 32 MiB; cap with headroom.
    est = (2 * N * E * 4 + 2 * tq * E * 4 + 2 * wbytes
           + N * 3 * E * 4 + 3 * tq * N * 4 + tq * E * 4)
    vmem_limit = int(min(100 * 1024 * 1024, max(32 * 1024 * 1024, 2 * est)))

    kernel = functools.partial(_mha_fused_kernel, num_heads=H, tq=tq,
                               approx_recip=approx_recip)
    return pl.pallas_call(
        kernel,
        grid=(B, nqt),
        in_specs=[
            pl.BlockSpec((1, N, E), lambda b, qt: (b, 0, 0)),   # x (full context)
            const_spec((E, E)),                                 # W_q (relayout, bf16)
            const_spec((1, E)),                                 # b_q
            const_spec((E, 2 * E)),                             # W_kv (relayout, bf16)
            const_spec((1, 2 * E)),                             # b_kv
            const_spec((E, E)),                                 # W_proj^T / sqrt(E)
            const_spec((1, E)),                                 # b_proj
        ],
        out_specs=pl.BlockSpec((1, tq, E), lambda b, qt: (b, qt, 0)),
        out_shape=jax.ShapeDtypeStruct((B, N, E), x.dtype),
        scratch_shapes=[pltpu.VMEM((tq, E), jnp.float32)],      # head-concat slab
        compiler_params=pltpu.CompilerParams(
            dimension_semantics=("parallel", "parallel"),
            vmem_limit_bytes=vmem_limit),
        cost_estimate=cost,
    )(x, W_q, b_q, W_kv, b_kv, Wp_t, bp)


def mha_mcf_forward(x, prepared, *, num_heads, approx_recip=True):
    try:
        out = _mha_mcf_call(x, prepared, num_heads=num_heads,
                            approx_recip=approx_recip, single_buffer_weights=True)
        return jax.block_until_ready(out)
    except Exception:
        # Fallback if this jax build rejects pl.Buffered(1) single-buffering of the
        # grid-invariant weight blocks; semantics are identical, only VMEM usage
        # differs (weights get the default double buffer).
        out = _mha_mcf_call(x, prepared, num_heads=num_heads,
                            approx_recip=approx_recip, single_buffer_weights=False)
        return jax.block_until_ready(out)


# Pure-JAX reference mirroring the PyTorch forward (for validation).
def mha_mcf_reference(x, params, *, num_heads):
    W_qkv, b_qkv, W_proj, b_proj = params
    B, N, E = x.shape
    H = num_heads
    d = E // H
    qkv = x @ W_qkv.T + b_qkv                                    # (B, N, 3E)
    qkv = qkv.reshape(B, N, H, d, 3).transpose(4, 0, 2, 1, 3)    # (3, B, H, N, d)
    q, k, v = qkv[0], qkv[1], qkv[2]
    energy = jnp.einsum('bhqd,bhkd->bhqk', q, k)
    att = jax.nn.softmax(energy, axis=-1) / (float(E) ** 0.5)
    out = jnp.einsum('bhal,bhlv->bhav', att, v)
    out = out.transpose(0, 2, 1, 3).reshape(B, N, E)
    return out @ W_proj.T + b_proj


if __name__ == "__main__":
    # Small shapes consistent with the module: emb_size divisible by heads.
    B, N, E, H = 2, 8, 32, 4

    key = jax.random.PRNGKey(0)
    kx, k1, k2, k3, k4 = jax.random.split(key, 5)
    x = jax.random.normal(kx, (B, N, E), dtype=jnp.float32)

    # Deterministic PyTorch-Linear-style uniform(-1/sqrt(fan_in), +) init.
    bound = 1.0 / (E ** 0.5)
    W_qkv = jax.random.uniform(k1, (3 * E, E), minval=-bound, maxval=bound,
                               dtype=jnp.float32)
    b_qkv = jax.random.uniform(k2, (3 * E,), minval=-bound, maxval=bound,
                               dtype=jnp.float32)
    W_proj = jax.random.uniform(k3, (E, E), minval=-bound, maxval=bound,
                                dtype=jnp.float32)
    b_proj = jax.random.uniform(k4, (E,), minval=-bound, maxval=bound,
                                dtype=jnp.float32)
    params = (W_qkv, b_qkv, W_proj, b_proj)

    prepared = prepare_params(params, num_heads=H)   # one-time relayout + bf16 cast
    out = mha_mcf_forward(x, prepared, num_heads=H)
    ref = mha_mcf_reference(x, params, num_heads=H)

    assert out.shape == (B, N, E), out.shape
    # Tolerance relaxed vs. exact f32 math: bf16 MXU operands (f32 accumulation)
    # plus the EUP approximate reciprocal in the softmax normalization.
    max_diff = float(jnp.max(jnp.abs(out - ref)))
    assert jnp.allclose(out, ref, atol=5e-2, rtol=5e-2), max_diff
    print("KERNEL_OK")
</pallas_src>

<mosaic_0001>
module attributes {stable_mosaic.version = 11 : i64} {
  func.func @_mha_fused_kernel(%arg0: i32, %arg1: i32, %arg2: memref<1x8x32xf32, #tpu.memory_space<vmem>>, %arg3: memref<32x32xbf16, #tpu.memory_space<vmem>>, %arg4: memref<1x32xf32, #tpu.memory_space<vmem>>, %arg5: memref<32x64xbf16, #tpu.memory_space<vmem>>, %arg6: memref<1x64xf32, #tpu.memory_space<vmem>>, %arg7: memref<32x32xbf16, #tpu.memory_space<vmem>>, %arg8: memref<1x32xf32, #tpu.memory_space<vmem>>, %arg9: memref<1x8x32xf32, #tpu.memory_space<vmem>>, %arg10: memref<8x32xf32, #tpu.memory_space<vmem>>) attributes {dimension_semantics = [#tpu.dimension_semantics<parallel>, #tpu.dimension_semantics<parallel>], iteration_bounds = array<i64: 2, 1>, scalar_prefetch = 0 : i64, scratch_operands = 1 : i64, tpu.core_type = #tpu.core_type<tc>, window_params = [{transform_indices = @transform_0, window_bounds = array<i64: 1, 8, 32>}, {pipeline_mode = #tpu.pipeline_mode<synchronous>, transform_indices = @transform_1, window_bounds = array<i64: 32, 32>}, {pipeline_mode = #tpu.pipeline_mode<synchronous>, transform_indices = @transform_2, window_bounds = array<i64: 1, 32>}, {pipeline_mode = #tpu.pipeline_mode<synchronous>, transform_indices = @transform_3, window_bounds = array<i64: 32, 64>}, {pipeline_mode = #tpu.pipeline_mode<synchronous>, transform_indices = @transform_4, window_bounds = array<i64: 1, 64>}, {pipeline_mode = #tpu.pipeline_mode<synchronous>, transform_indices = @transform_5, window_bounds = array<i64: 32, 32>}, {pipeline_mode = #tpu.pipeline_mode<synchronous>, transform_indices = @transform_6, window_bounds = array<i64: 1, 32>}, {transform_indices = @transform_7, window_bounds = array<i64: 1, 8, 32>}]} {
    %c0 = arith.constant 0 : index
    %c0_0 = arith.constant 0 : index
    %c0_1 = arith.constant 0 : index
    %0 = vector.load %arg2[%c0, %c0_0, %c0_1] : memref<1x8x32xf32, #tpu.memory_space<vmem>>, vector<1x8x32xf32>
    %1 = vector.shape_cast %0 : vector<1x8x32xf32> to vector<8x32xf32>
    %2 = arith.truncf %1 : vector<8x32xf32> to vector<8x32xbf16>
    %c0_2 = arith.constant 0 : index
    %c0_3 = arith.constant 0 : index
    %3 = vector.load %arg3[%c0_2, %c0_3] : memref<32x32xbf16, #tpu.memory_space<vmem>>, vector<32x32xbf16>
    %cst = arith.constant dense<0.000000e+00> : vector<8x32xf32>
    %4 = tpu.matmul %2, %3, %cst {dimension_numbers = #tpu.dot_dimension_numbers<[1], [0], [0], [1], [0, 0, 1, 1], [], []>} : vector<8x32xbf16>, vector<32x32xbf16>, vector<8x32xf32> -> vector<8x32xf32>
    %c0_4 = arith.constant 0 : index
    %c0_5 = arith.constant 0 : index
    %5 = vector.load %arg4[%c0_4, %c0_5] : memref<1x32xf32, #tpu.memory_space<vmem>>, vector<1x32xf32>
    %6 = vector.broadcast %5 : vector<1x32xf32> to vector<8x32xf32>
    %7 = arith.addf %4, %6 : vector<8x32xf32>
    %c0_6 = arith.constant 0 : index
    %c0_7 = arith.constant 0 : index
    %8 = vector.load %arg5[%c0_6, %c0_7] : memref<32x64xbf16, #tpu.memory_space<vmem>>, vector<32x64xbf16>
    %cst_8 = arith.constant dense<0.000000e+00> : vector<8x64xf32>
    %9 = tpu.matmul %2, %8, %cst_8 {dimension_numbers = #tpu.dot_dimension_numbers<[1], [0], [0], [1], [0, 0, 1, 1], [], []>} : vector<8x32xbf16>, vector<32x64xbf16>, vector<8x64xf32> -> vector<8x64xf32>
    %c0_9 = arith.constant 0 : index
    %c0_10 = arith.constant 0 : index
    %10 = vector.load %arg6[%c0_9, %c0_10] : memref<1x64xf32, #tpu.memory_space<vmem>>, vector<1x64xf32>
    %11 = vector.broadcast %10 : vector<1x64xf32> to vector<8x64xf32>
    %12 = arith.addf %9, %11 : vector<8x64xf32>
    %13 = arith.truncf %7 : vector<8x32xf32> to vector<8x32xbf16>
    %14 = vector.extract_strided_slice %12 {offsets = [0, 0], sizes = [8, 32], strides = [1, 1]} : vector<8x64xf32> to vector<8x32xf32>
    %15 = arith.truncf %14 : vector<8x32xf32> to vector<8x32xbf16>
    %16 = vector.extract_strided_slice %12 {offsets = [0, 32], sizes = [8, 32], strides = [1, 1]} : vector<8x64xf32> to vector<8x32xf32>
    %17 = arith.truncf %16 : vector<8x32xf32> to vector<8x32xbf16>
    %18 = vector.extract_strided_slice %13 {offsets = [0, 0], sizes = [8, 8], strides = [1, 1]} : vector<8x32xbf16> to vector<8x8xbf16>
    %19 = vector.extract_strided_slice %15 {offsets = [0, 0], sizes = [8, 8], strides = [1, 1]} : vector<8x32xbf16> to vector<8x8xbf16>
    %20 = vector.extract_strided_slice %17 {offsets = [0, 0], sizes = [8, 8], strides = [1, 1]} : vector<8x32xbf16> to vector<8x8xbf16>
    %cst_11 = arith.constant dense<0.000000e+00> : vector<8x8xf32>
    %21 = tpu.matmul %18, %19, %cst_11 {dimension_numbers = #tpu.dot_dimension_numbers<[1], [1], [0], [0], [0, 0, 1, 0], [], []>} : vector<8x8xbf16>, vector<8x8xbf16>, vector<8x8xf32> -> vector<8x8xf32>
    %cst_12 = arith.constant dense<0xFF800000> : vector<8xf32>
    %22 = vector.multi_reduction <maximumf>, %21, %cst_12 [1] : vector<8x8xf32> to vector<8xf32>
    %23 = vector.shape_cast %22 : vector<8xf32> to vector<8x1xf32>
    %24 = vector.broadcast %23 : vector<8x1xf32> to vector<8x8xf32>
    %25 = arith.subf %21, %24 : vector<8x8xf32>
    %26 = math.exp %25 : vector<8x8xf32>
    %cst_13 = arith.constant dense<0.000000e+00> : vector<8xf32>
    %27 = vector.multi_reduction <add>, %26, %cst_13 [1] : vector<8x8xf32> to vector<8xf32>
    %28 = vector.shape_cast %27 : vector<8xf32> to vector<8x1xf32>
    %29 = tpu.reciprocal %28 {approx = true} : vector<8x1xf32> -> vector<8x1xf32>
    %30 = vector.broadcast %29 : vector<8x1xf32> to vector<8x8xf32>
    %31 = arith.mulf %26, %30 : vector<8x8xf32>
    %32 = arith.truncf %31 : vector<8x8xf32> to vector<8x8xbf16>
    %cst_14 = arith.constant dense<0.000000e+00> : vector<8x8xf32>
    %33 = tpu.matmul %32, %20, %cst_14 {dimension_numbers = #tpu.dot_dimension_numbers<[1], [0], [0], [1], [0, 0, 1, 1], [], []>} : vector<8x8xbf16>, vector<8x8xbf16>, vector<8x8xf32> -> vector<8x8xf32>
    %c0_15 = arith.constant 0 : index
    %c0_16 = arith.constant 0 : index
    %34 = vector.load %arg10[%c0_15, %c0_16] : memref<8x32xf32, #tpu.memory_space<vmem>>, vector<8x8xf32>
    tpu.vector_store %arg10[%c0_15, %c0_16], %33 {strides = array<i32>} : memref<8x32xf32, #tpu.memory_space<vmem>>, vector<8x8xf32>,
    %35 = vector.extract_strided_slice %13 {offsets = [0, 8], sizes = [8, 8], strides = [1, 1]} : vector<8x32xbf16> to vector<8x8xbf16>
    %36 = vector.extract_strided_slice %15 {offsets = [0, 8], sizes = [8, 8], strides = [1, 1]} : vector<8x32xbf16> to vector<8x8xbf16>
    %37 = vector.extract_strided_slice %17 {offsets = [0, 8], sizes = [8, 8], strides = [1, 1]} : vector<8x32xbf16> to vector<8x8xbf16>
    %cst_17 = arith.constant dense<0.000000e+00> : vector<8x8xf32>
    %38 = tpu.matmul %35, %36, %cst_17 {dimension_numbers = #tpu.dot_dimension_numbers<[1], [1], [0], [0], [0, 0, 1, 0], [], []>} : vector<8x8xbf16>, vector<8x8xbf16>, vector<8x8xf32> -> vector<8x8xf32>
    %cst_18 = arith.constant dense<0xFF800000> : vector<8xf32>
    %39 = vector.multi_reduction <maximumf>, %38, %cst_18 [1] : vector<8x8xf32> to vector<8xf32>
    %40 = vector.shape_cast %39 : vector<8xf32> to vector<8x1xf32>
    %41 = vector.broadcast %40 : vector<8x1xf32> to vector<8x8xf32>
    %42 = arith.subf %38, %41 : vector<8x8xf32>
    %43 = math.exp %42 : vector<8x8xf32>
    %cst_19 = arith.constant dense<0.000000e+00> : vector<8xf32>
    %44 = vector.multi_reduction <add>, %43, %cst_19 [1] : vector<8x8xf32> to vector<8xf32>
    %45 = vector.shape_cast %44 : vector<8xf32> to vector<8x1xf32>
    %46 = tpu.reciprocal %45 {approx = true} : vector<8x1xf32> -> vector<8x1xf32>
    %47 = vector.broadcast %46 : vector<8x1xf32> to vector<8x8xf32>
    %48 = arith.mulf %43, %47 : vector<8x8xf32>
    %49 = arith.truncf %48 : vector<8x8xf32> to vector<8x8xbf16>
    %cst_20 = arith.constant dense<0.000000e+00> : vector<8x8xf32>
    %50 = tpu.matmul %49, %37, %cst_20 {dimension_numbers = #tpu.dot_dimension_numbers<[1], [0], [0], [1], [0, 0, 1, 1], [], []>} : vector<8x8xbf16>, vector<8x8xbf16>, vector<8x8xf32> -> vector<8x8xf32>
    %c0_21 = arith.constant 0 : index
    %c8 = arith.constant 8 : index
    %51 = vector.load %arg10[%c0_21, %c8] : memref<8x32xf32, #tpu.memory_space<vmem>>, vector<8x8xf32>
    tpu.vector_store %arg10[%c0_21, %c8], %50 {strides = array<i32>} : memref<8x32xf32, #tpu.memory_space<vmem>>, vector<8x8xf32>,
    %52 = vector.extract_strided_slice %13 {offsets = [0, 16], sizes = [8, 8], strides = [1, 1]} : vector<8x32xbf16> to vector<8x8xbf16>
    %53 = vector.extract_strided_slice %15 {offsets = [0, 16], sizes = [8, 8], strides = [1, 1]} : vector<8x32xbf16> to vector<8x8xbf16>
    %54 = vector.extract_strided_slice %17 {offsets = [0, 16], sizes = [8, 8], strides = [1, 1]} : vector<8x32xbf16> to vector<8x8xbf16>
    %cst_22 = arith.constant dense<0.000000e+00> : vector<8x8xf32>
    %55 = tpu.matmul %52, %53, %cst_22 {dimension_numbers = #tpu.dot_dimension_numbers<[1], [1], [0], [0], [0, 0, 1, 0], [], []>} : vector<8x8xbf16>, vector<8x8xbf16>, vector<8x8xf32> -> vector<8x8xf32>
    %cst_23 = arith.constant dense<0xFF800000> : vector<8xf32>
    %56 = vector.multi_reduction <maximumf>, %55, %cst_23 [1] : vector<8x8xf32> to vector<8xf32>
    %57 = vector.shape_cast %56 : vector<8xf32> to vector<8x1xf32>
    %58 = vector.broadcast %57 : vector<8x1xf32> to vector<8x8xf32>
    %59 = arith.subf %55, %58 : vector<8x8xf32>
    %60 = math.exp %59 : vector<8x8xf32>
    %cst_24 = arith.constant dense<0.000000e+00> : vector<8xf32>
    %61 = vector.multi_reduction <add>, %60, %cst_24 [1] : vector<8x8xf32> to vector<8xf32>
    %62 = vector.shape_cast %61 : vector<8xf32> to vector<8x1xf32>
    %63 = tpu.reciprocal %62 {approx = true} : vector<8x1xf32> -> vector<8x1xf32>
    %64 = vector.broadcast %63 : vector<8x1xf32> to vector<8x8xf32>
    %65 = arith.mulf %60, %64 : vector<8x8xf32>
    %66 = arith.truncf %65 : vector<8x8xf32> to vector<8x8xbf16>
    %cst_25 = arith.constant dense<0.000000e+00> : vector<8x8xf32>
    %67 = tpu.matmul %66, %54, %cst_25 {dimension_numbers = #tpu.dot_dimension_numbers<[1], [0], [0], [1], [0, 0, 1, 1], [], []>} : vector<8x8xbf16>, vector<8x8xbf16>, vector<8x8xf32> -> vector<8x8xf32>
    %c0_26 = arith.constant 0 : index
    %c16 = arith.constant 16 : index
    %68 = vector.load %arg10[%c0_26, %c16] : memref<8x32xf32, #tpu.memory_space<vmem>>, vector<8x8xf32>
    tpu.vector_store %arg10[%c0_26, %c16], %67 {strides = array<i32>} : memref<8x32xf32, #tpu.memory_space<vmem>>, vector<8x8xf32>,
    %69 = vector.extract_strided_slice %13 {offsets = [0, 24], sizes = [8, 8], strides = [1, 1]} : vector<8x32xbf16> to vector<8x8xbf16>
    %70 = vector.extract_strided_slice %15 {offsets = [0, 24], sizes = [8, 8], strides = [1, 1]} : vector<8x32xbf16> to vector<8x8xbf16>
    %71 = vector.extract_strided_slice %17 {offsets = [0, 24], sizes = [8, 8], strides = [1, 1]} : vector<8x32xbf16> to vector<8x8xbf16>
    %cst_27 = arith.constant dense<0.000000e+00> : vector<8x8xf32>
    %72 = tpu.matmul %69, %70, %cst_27 {dimension_numbers = #tpu.dot_dimension_numbers<[1], [1], [0], [0], [0, 0, 1, 0], [], []>} : vector<8x8xbf16>, vector<8x8xbf16>, vector<8x8xf32> -> vector<8x8xf32>
    %cst_28 = arith.constant dense<0xFF800000> : vector<8xf32>
    %73 = vector.multi_reduction <maximumf>, %72, %cst_28 [1] : vector<8x8xf32> to vector<8xf32>
    %74 = vector.shape_cast %73 : vector<8xf32> to vector<8x1xf32>
    %75 = vector.broadcast %74 : vector<8x1xf32> to vector<8x8xf32>
    %76 = arith.subf %72, %75 : vector<8x8xf32>
    %77 = math.exp %76 : vector<8x8xf32>
    %cst_29 = arith.constant dense<0.000000e+00> : vector<8xf32>
    %78 = vector.multi_reduction <add>, %77, %cst_29 [1] : vector<8x8xf32> to vector<8xf32>
    %79 = vector.shape_cast %78 : vector<8xf32> to vector<8x1xf32>
    %80 = tpu.reciprocal %79 {approx = true} : vector<8x1xf32> -> vector<8x1xf32>
    %81 = vector.broadcast %80 : vector<8x1xf32> to vector<8x8xf32>
    %82 = arith.mulf %77, %81 : vector<8x8xf32>
    %83 = arith.truncf %82 : vector<8x8xf32> to vector<8x8xbf16>
    %cst_30 = arith.constant dense<0.000000e+00> : vector<8x8xf32>
    %84 = tpu.matmul %83, %71, %cst_30 {dimension_numbers = #tpu.dot_dimension_numbers<[1], [0], [0], [1], [0, 0, 1, 1], [], []>} : vector<8x8xbf16>, vector<8x8xbf16>, vector<8x8xf32> -> vector<8x8xf32>
    %c0_31 = arith.constant 0 : index
    %c24 = arith.constant 24 : index
    %85 = vector.load %arg10[%c0_31, %c24] : memref<8x32xf32, #tpu.memory_space<vmem>>, vector<8x8xf32>
    tpu.vector_store %arg10[%c0_31, %c24], %84 {strides = array<i32>} : memref<8x32xf32, #tpu.memory_space<vmem>>, vector<8x8xf32>,
    %c0_32 = arith.constant 0 : index
    %c0_33 = arith.constant 0 : index
    %86 = vector.load %arg10[%c0_32, %c0_33] : memref<8x32xf32, #tpu.memory_space<vmem>>, vector<8x32xf32>
    %87 = arith.truncf %86 : vector<8x32xf32> to vector<8x32xbf16>
    %c0_34 = arith.constant 0 : index
    %c0_35 = arith.constant 0 : index
    %88 = vector.load %arg7[%c0_34, %c0_35] : memref<32x32xbf16, #tpu.memory_space<vmem>>, vector<32x32xbf16>
    %cst_36 = arith.constant dense<0.000000e+00> : vector<8x32xf32>
    %89 = tpu.matmul %87, %88, %cst_36 {dimension_numbers = #tpu.dot_dimension_numbers<[1], [0], [0], [1], [0, 0, 1, 1], [], []>} : vector<8x32xbf16>, vector<32x32xbf16>, vector<8x32xf32> -> vector<8x32xf32>
    %c0_37 = arith.constant 0 : index
    %c0_38 = arith.constant 0 : index
    %90 = vector.load %arg8[%c0_37, %c0_38] : memref<1x32xf32, #tpu.memory_space<vmem>>, vector<1x32xf32>
    %91 = vector.broadcast %90 : vector<1x32xf32> to vector<8x32xf32>
    %92 = arith.addf %89, %91 : vector<8x32xf32>
    %c0_39 = arith.constant 0 : index
    %c0_40 = arith.constant 0 : index
    %c0_41 = arith.constant 0 : index
    %93 = vector.load %arg9[%c0_39, %c0_40, %c0_41] : memref<1x8x32xf32, #tpu.memory_space<vmem>>, vector<1x8x32xf32>
    %94 = vector.shape_cast %93 : vector<1x8x32xf32> to vector<8x32xf32>
    %95 = vector.shape_cast %92 : vector<8x32xf32> to vector<1x8x32xf32>
    tpu.vector_store %arg9[%c0_39, %c0_40, %c0_41], %95 {strides = array<i32>} : memref<1x8x32xf32, #tpu.memory_space<vmem>>, vector<1x8x32xf32>,
    return
  }
  func.func @transform_0(%arg0: i32, %arg1: i32) -> (i32, i32, i32) {
    %c0_i32 = arith.constant 0 : i32
    %c0_i32_0 = arith.constant 0 : i32
    %c0_i32_1 = arith.constant 0 : i32
    return %arg0, %c0_i32, %c0_i32_0 : i32, i32, i32
  }
  func.func @transform_1(%arg0: i32, %arg1: i32) -> (i32, i32) {
    %c0_i32 = arith.constant 0 : i32
    %c0_i32_0 = arith.constant 0 : i32
    %c0_i32_1 = arith.constant 0 : i32
    return %c0_i32, %c0_i32_0 : i32, i32
  }
  func.func @transform_2(%arg0: i32, %arg1: i32) -> (i32, i32) {
    %c0_i32 = arith.constant 0 : i32
    %c0_i32_0 = arith.constant 0 : i32
    %c0_i32_1 = arith.constant 0 : i32
    return %c0_i32, %c0_i32_0 : i32, i32
  }
  func.func @transform_3(%arg0: i32, %arg1: i32) -> (i32, i32) {
    %c0_i32 = arith.constant 0 : i32
    %c0_i32_0 = arith.constant 0 : i32
    %c0_i32_1 = arith.constant 0 : i32
    return %c0_i32, %c0_i32_0 : i32, i32
  }
  func.func @transform_4(%arg0: i32, %arg1: i32) -> (i32, i32) {
    %c0_i32 = arith.constant 0 : i32
    %c0_i32_0 = arith.constant 0 : i32
    %c0_i32_1 = arith.constant 0 : i32
    return %c0_i32, %c0_i32_0 : i32, i32
  }
  func.func @transform_5(%arg0: i32, %arg1: i32) -> (i32, i32) {
    %c0_i32 = arith.constant 0 : i32
    %c0_i32_0 = arith.constant 0 : i32
    %c0_i32_1 = arith.constant 0 : i32
    return %c0_i32, %c0_i32_0 : i32, i32
  }
  func.func @transform_6(%arg0: i32, %arg1: i32) -> (i32, i32) {
    %c0_i32 = arith.constant 0 : i32
    %c0_i32_0 = arith.constant 0 : i32
    %c0_i32_1 = arith.constant 0 : i32
    return %c0_i32, %c0_i32_0 : i32, i32
  }
  func.func @transform_7(%arg0: i32, %arg1: i32) -> (i32, i32, i32) {
    %c0_i32 = arith.constant 0 : i32
    %c0_i32_0 = arith.constant 0 : i32
    return %arg0, %arg1, %c0_i32 : i32, i32, i32
  }
}

module attributes {stable_mosaic.version = 11 : i64} {
  func.func @_mha_fused_kernel(%arg0: i32, %arg1: i32, %arg2: memref<1x8x32xf32, #tpu.memory_space<vmem>>, %arg3: memref<32x32xbf16, #tpu.memory_space<vmem>>, %arg4: memref<1x32xf32, #tpu.memory_space<vmem>>, %arg5: memref<32x64xbf16, #tpu.memory_space<vmem>>, %arg6: memref<1x64xf32, #tpu.memory_space<vmem>>, %arg7: memref<32x32xbf16, #tpu.memory_space<vmem>>, %arg8: memref<1x32xf32, #tpu.memory_space<vmem>>, %arg9: memref<1x8x32xf32, #tpu.memory_space<vmem>>, %arg10: memref<8x32xf32, #tpu.memory_space<vmem>>) attributes {dimension_semantics = [#tpu.dimension_semantics<parallel>, #tpu.dimension_semantics<parallel>], iteration_bounds = array<i64: 2, 1>, scalar_prefetch = 0 : i64, scratch_operands = 1 : i64, tpu.core_type = #tpu.core_type<tc>, window_params = [{transform_indices = @transform_0, window_bounds = array<i64: 1, 8, 32>}, {pipeline_mode = #tpu.pipeline_mode<synchronous>, transform_indices = @transform_1, window_bounds = array<i64: 32, 32>}, {pipeline_mode = #tpu.pipeline_mode<synchronous>, transform_indices = @transform_2, window_bounds = array<i64: 1, 32>}, {pipeline_mode = #tpu.pipeline_mode<synchronous>, transform_indices = @transform_3, window_bounds = array<i64: 32, 64>}, {pipeline_mode = #tpu.pipeline_mode<synchronous>, transform_indices = @transform_4, window_bounds = array<i64: 1, 64>}, {pipeline_mode = #tpu.pipeline_mode<synchronous>, transform_indices = @transform_5, window_bounds = array<i64: 32, 32>}, {pipeline_mode = #tpu.pipeline_mode<synchronous>, transform_indices = @transform_6, window_bounds = array<i64: 1, 32>}, {transform_indices = @transform_7, window_bounds = array<i64: 1, 8, 32>}]} {
    %c0 = arith.constant 0 : index
    %c0_0 = arith.constant 0 : index
    %c0_1 = arith.constant 0 : index
    %0 = vector.load %arg2[%c0, %c0_0, %c0_1] : memref<1x8x32xf32, #tpu.memory_space<vmem>>, vector<1x8x32xf32>
    %1 = vector.shape_cast %0 : vector<1x8x32xf32> to vector<8x32xf32>
    %2 = arith.truncf %1 : vector<8x32xf32> to vector<8x32xbf16>
    %c0_2 = arith.constant 0 : index
    %c0_3 = arith.constant 0 : index
    %3 = vector.load %arg3[%c0_2, %c0_3] : memref<32x32xbf16, #tpu.memory_space<vmem>>, vector<32x32xbf16>
    %cst = arith.constant dense<0.000000e+00> : vector<8x32xf32>
    %4 = tpu.matmul %2, %3, %cst {dimension_numbers = #tpu.dot_dimension_numbers<[1], [0], [0], [1], [0, 0, 1, 1], [], []>} : vector<8x32xbf16>, vector<32x32xbf16>, vector<8x32xf32> -> vector<8x32xf32>
    %c0_4 = arith.constant 0 : index
    %c0_5 = arith.constant 0 : index
    %5 = vector.load %arg4[%c0_4, %c0_5] : memref<1x32xf32, #tpu.memory_space<vmem>>, vector<1x32xf32>
    %6 = vector.broadcast %5 : vector<1x32xf32> to vector<8x32xf32>
    %7 = arith.addf %4, %6 : vector<8x32xf32>
    %c0_6 = arith.constant 0 : index
    %c0_7 = arith.constant 0 : index
    %8 = vector.load %arg5[%c0_6, %c0_7] : memref<32x64xbf16, #tpu.memory_space<vmem>>, vector<32x64xbf16>
    %cst_8 = arith.constant dense<0.000000e+00> : vector<8x64xf32>
    %9 = tpu.matmul %2, %8, %cst_8 {dimension_numbers = #tpu.dot_dimension_numbers<[1], [0], [0], [1], [0, 0, 1, 1], [], []>} : vector<8x32xbf16>, vector<32x64xbf16>, vector<8x64xf32> -> vector<8x64xf32>
    %c0_9 = arith.constant 0 : index
    %c0_10 = arith.constant 0 : index
    %10 = vector.load %arg6[%c0_9, %c0_10] : memref<1x64xf32, #tpu.memory_space<vmem>>, vector<1x64xf32>
    %11 = vector.broadcast %10 : vector<1x64xf32> to vector<8x64xf32>
    %12 = arith.addf %9, %11 : vector<8x64xf32>
    %13 = arith.truncf %7 : vector<8x32xf32> to vector<8x32xbf16>
    %14 = vector.extract_strided_slice %12 {offsets = [0, 0], sizes = [8, 32], strides = [1, 1]} : vector<8x64xf32> to vector<8x32xf32>
    %15 = arith.truncf %14 : vector<8x32xf32> to vector<8x32xbf16>
    %16 = vector.extract_strided_slice %12 {offsets = [0, 32], sizes = [8, 32], strides = [1, 1]} : vector<8x64xf32> to vector<8x32xf32>
    %17 = arith.truncf %16 : vector<8x32xf32> to vector<8x32xbf16>
    %18 = vector.extract_strided_slice %13 {offsets = [0, 0], sizes = [8, 8], strides = [1, 1]} : vector<8x32xbf16> to vector<8x8xbf16>
    %19 = vector.extract_strided_slice %15 {offsets = [0, 0], sizes = [8, 8], strides = [1, 1]} : vector<8x32xbf16> to vector<8x8xbf16>
    %20 = vector.extract_strided_slice %17 {offsets = [0, 0], sizes = [8, 8], strides = [1, 1]} : vector<8x32xbf16> to vector<8x8xbf16>
    %cst_11 = arith.constant dense<0.000000e+00> : vector<8x8xf32>
    %21 = tpu.matmul %18, %19, %cst_11 {dimension_numbers = #tpu.dot_dimension_numbers<[1], [1], [0], [0], [0, 0, 1, 0], [], []>} : vector<8x8xbf16>, vector<8x8xbf16>, vector<8x8xf32> -> vector<8x8xf32>
    %cst_12 = arith.constant dense<0xFF800000> : vector<8xf32>
    %22 = vector.multi_reduction <maximumf>, %21, %cst_12 [1] : vector<8x8xf32> to vector<8xf32>
    %23 = vector.shape_cast %22 : vector<8xf32> to vector<8x1xf32>
    %24 = vector.broadcast %23 : vector<8x1xf32> to vector<8x8xf32>
    %25 = arith.subf %21, %24 : vector<8x8xf32>
    %26 = math.exp %25 : vector<8x8xf32>
    %cst_13 = arith.constant dense<0.000000e+00> : vector<8xf32>
    %27 = vector.multi_reduction <add>, %26, %cst_13 [1] : vector<8x8xf32> to vector<8xf32>
    %28 = vector.shape_cast %27 : vector<8xf32> to vector<8x1xf32>
    %29 = tpu.reciprocal %28 {approx = true} : vector<8x1xf32> -> vector<8x1xf32>
    %30 = vector.broadcast %29 : vector<8x1xf32> to vector<8x8xf32>
    %31 = arith.mulf %26, %30 : vector<8x8xf32>
    %32 = arith.truncf %31 : vector<8x8xf32> to vector<8x8xbf16>
    %cst_14 = arith.constant dense<0.000000e+00> : vector<8x8xf32>
    %33 = tpu.matmul %32, %20, %cst_14 {dimension_numbers = #tpu.dot_dimension_numbers<[1], [0], [0], [1], [0, 0, 1, 1], [], []>} : vector<8x8xbf16>, vector<8x8xbf16>, vector<8x8xf32> -> vector<8x8xf32>
    %c0_15 = arith.constant 0 : index
    %c0_16 = arith.constant 0 : index
    %34 = vector.load %arg10[%c0_15, %c0_16] : memref<8x32xf32, #tpu.memory_space<vmem>>, vector<8x8xf32>
    tpu.vector_store %arg10[%c0_15, %c0_16], %33 {strides = array<i32>} : memref<8x32xf32, #tpu.memory_space<vmem>>, vector<8x8xf32>,
    %35 = vector.extract_strided_slice %13 {offsets = [0, 8], sizes = [8, 8], strides = [1, 1]} : vector<8x32xbf16> to vector<8x8xbf16>
    %36 = vector.extract_strided_slice %15 {offsets = [0, 8], sizes = [8, 8], strides = [1, 1]} : vector<8x32xbf16> to vector<8x8xbf16>
    %37 = vector.extract_strided_slice %17 {offsets = [0, 8], sizes = [8, 8], strides = [1, 1]} : vector<8x32xbf16> to vector<8x8xbf16>
    %cst_17 = arith.constant dense<0.000000e+00> : vector<8x8xf32>
    %38 = tpu.matmul %35, %36, %cst_17 {dimension_numbers = #tpu.dot_dimension_numbers<[1], [1], [0], [0], [0, 0, 1, 0], [], []>} : vector<8x8xbf16>, vector<8x8xbf16>, vector<8x8xf32> -> vector<8x8xf32>
    %cst_18 = arith.constant dense<0xFF800000> : vector<8xf32>
    %39 = vector.multi_reduction <maximumf>, %38, %cst_18 [1] : vector<8x8xf32> to vector<8xf32>
    %40 = vector.shape_cast %39 : vector<8xf32> to vector<8x1xf32>
    %41 = vector.broadcast %40 : vector<8x1xf32> to vector<8x8xf32>
    %42 = arith.subf %38, %41 : vector<8x8xf32>
    %43 = math.exp %42 : vector<8x8xf32>
    %cst_19 = arith.constant dense<0.000000e+00> : vector<8xf32>
    %44 = vector.multi_reduction <add>, %43, %cst_19 [1] : vector<8x8xf32> to vector<8xf32>
    %45 = vector.shape_cast %44 : vector<8xf32> to vector<8x1xf32>
    %46 = tpu.reciprocal %45 {approx = true} : vector<8x1xf32> -> vector<8x1xf32>
    %47 = vector.broadcast %46 : vector<8x1xf32> to vector<8x8xf32>
    %48 = arith.mulf %43, %47 : vector<8x8xf32>
    %49 = arith.truncf %48 : vector<8x8xf32> to vector<8x8xbf16>
    %cst_20 = arith.constant dense<0.000000e+00> : vector<8x8xf32>
    %50 = tpu.matmul %49, %37, %cst_20 {dimension_numbers = #tpu.dot_dimension_numbers<[1], [0], [0], [1], [0, 0, 1, 1], [], []>} : vector<8x8xbf16>, vector<8x8xbf16>, vector<8x8xf32> -> vector<8x8xf32>
    %c0_21 = arith.constant 0 : index
    %c8 = arith.constant 8 : index
    %51 = vector.load %arg10[%c0_21, %c8] : memref<8x32xf32, #tpu.memory_space<vmem>>, vector<8x8xf32>
    tpu.vector_store %arg10[%c0_21, %c8], %50 {strides = array<i32>} : memref<8x32xf32, #tpu.memory_space<vmem>>, vector<8x8xf32>,
    %52 = vector.extract_strided_slice %13 {offsets = [0, 16], sizes = [8, 8], strides = [1, 1]} : vector<8x32xbf16> to vector<8x8xbf16>
    %53 = vector.extract_strided_slice %15 {offsets = [0, 16], sizes = [8, 8], strides = [1, 1]} : vector<8x32xbf16> to vector<8x8xbf16>
    %54 = vector.extract_strided_slice %17 {offsets = [0, 16], sizes = [8, 8], strides = [1, 1]} : vector<8x32xbf16> to vector<8x8xbf16>
    %cst_22 = arith.constant dense<0.000000e+00> : vector<8x8xf32>
    %55 = tpu.matmul %52, %53, %cst_22 {dimension_numbers = #tpu.dot_dimension_numbers<[1], [1], [0], [0], [0, 0, 1, 0], [], []>} : vector<8x8xbf16>, vector<8x8xbf16>, vector<8x8xf32> -> vector<8x8xf32>
    %cst_23 = arith.constant dense<0xFF800000> : vector<8xf32>
    %56 = vector.multi_reduction <maximumf>, %55, %cst_23 [1] : vector<8x8xf32> to vector<8xf32>
    %57 = vector.shape_cast %56 : vector<8xf32> to vector<8x1xf32>
    %58 = vector.broadcast %57 : vector<8x1xf32> to vector<8x8xf32>
    %59 = arith.subf %55, %58 : vector<8x8xf32>
    %60 = math.exp %59 : vector<8x8xf32>
    %cst_24 = arith.constant dense<0.000000e+00> : vector<8xf32>
    %61 = vector.multi_reduction <add>, %60, %cst_24 [1] : vector<8x8xf32> to vector<8xf32>
    %62 = vector.shape_cast %61 : vector<8xf32> to vector<8x1xf32>
    %63 = tpu.reciprocal %62 {approx = true} : vector<8x1xf32> -> vector<8x1xf32>
    %64 = vector.broadcast %63 : vector<8x1xf32> to vector<8x8xf32>
    %65 = arith.mulf %60, %64 : vector<8x8xf32>
    %66 = arith.truncf %65 : vector<8x8xf32> to vector<8x8xbf16>
    %cst_25 = arith.constant dense<0.000000e+00> : vector<8x8xf32>
    %67 = tpu.matmul %66, %54, %cst_25 {dimension_numbers = #tpu.dot_dimension_numbers<[1], [0], [0], [1], [0, 0, 1, 1], [], []>} : vector<8x8xbf16>, vector<8x8xbf16>, vector<8x8xf32> -> vector<8x8xf32>
    %c0_26 = arith.constant 0 : index
    %c16 = arith.constant 16 : index
    %68 = vector.load %arg10[%c0_26, %c16] : memref<8x32xf32, #tpu.memory_space<vmem>>, vector<8x8xf32>
    tpu.vector_store %arg10[%c0_26, %c16], %67 {strides = array<i32>} : memref<8x32xf32, #tpu.memory_space<vmem>>, vector<8x8xf32>,
    %69 = vector.extract_strided_slice %13 {offsets = [0, 24], sizes = [8, 8], strides = [1, 1]} : vector<8x32xbf16> to vector<8x8xbf16>
    %70 = vector.extract_strided_slice %15 {offsets = [0, 24], sizes = [8, 8], strides = [1, 1]} : vector<8x32xbf16> to vector<8x8xbf16>
    %71 = vector.extract_strided_slice %17 {offsets = [0, 24], sizes = [8, 8], strides = [1, 1]} : vector<8x32xbf16> to vector<8x8xbf16>
    %cst_27 = arith.constant dense<0.000000e+00> : vector<8x8xf32>
    %72 = tpu.matmul %69, %70, %cst_27 {dimension_numbers = #tpu.dot_dimension_numbers<[1], [1], [0], [0], [0, 0, 1, 0], [], []>} : vector<8x8xbf16>, vector<8x8xbf16>, vector<8x8xf32> -> vector<8x8xf32>
    %cst_28 = arith.constant dense<0xFF800000> : vector<8xf32>
    %73 = vector.multi_reduction <maximumf>, %72, %cst_28 [1] : vector<8x8xf32> to vector<8xf32>
    %74 = vector.shape_cast %73 : vector<8xf32> to vector<8x1xf32>
    %75 = vector.broadcast %74 : vector<8x1xf32> to vector<8x8xf32>
    %76 = arith.subf %72, %75 : vector<8x8xf32>
    %77 = math.exp %76 : vector<8x8xf32>
    %cst_29 = arith.constant dense<0.000000e+00> : vector<8xf32>
    %78 = vector.multi_reduction <add>, %77, %cst_29 [1] : vector<8x8xf32> to vector<8xf32>
    %79 = vector.shape_cast %78 : vector<8xf32> to vector<8x1xf32>
    %80 = tpu.reciprocal %79 {approx = true} : vector<8x1xf32> -> vector<8x1xf32>
    %81 = vector.broadcast %80 : vector<8x1xf32> to vector<8x8xf32>
    %82 = arith.mulf %77, %81 : vector<8x8xf32>
    %83 = arith.truncf %82 : vector<8x8xf32> to vector<8x8xbf16>
    %cst_30 = arith.constant dense<0.000000e+00> : vector<8x8xf32>
    %84 = tpu.matmul %83, %71, %cst_30 {dimension_numbers = #tpu.dot_dimension_numbers<[1], [0], [0], [1], [0, 0, 1, 1], [], []>} : vector<8x8xbf16>, vector<8x8xbf16>, vector<8x8xf32> -> vector<8x8xf32>
    %c0_31 = arith.constant 0 : index
    %c24 = arith.constant 24 : index
    %85 = vector.load %arg10[%c0_31, %c24] : memref<8x32xf32, #tpu.memory_space<vmem>>, vector<8x8xf32>
    tpu.vector_store %arg10[%c0_31, %c24], %84 {strides = array<i32>} : memref<8x32xf32, #tpu.memory_space<vmem>>, vector<8x8xf32>,
    %c0_32 = arith.constant 0 : index
    %c0_33 = arith.constant 0 : index
    %86 = vector.load %arg10[%c0_32, %c0_33] : memref<8x32xf32, #tpu.memory_space<vmem>>, vector<8x32xf32>
    %87 = arith.truncf %86 : vector<8x32xf32> to vector<8x32xbf16>
    %c0_34 = arith.constant 0 : index
    %c0_35 = arith.constant 0 : index
    %88 = vector.load %arg7[%c0_34, %c0_35] : memref<32x32xbf16, #tpu.memory_space<vmem>>, vector<32x32xbf16>
    %cst_36 = arith.constant dense<0.000000e+00> : vector<8x32xf32>
    %89 = tpu.matmul %87, %88, %cst_36 {dimension_numbers = #tpu.dot_dimension_numbers<[1], [0], [0], [1], [0, 0, 1, 1], [], []>} : vector<8x32xbf16>, vector<32x32xbf16>, vector<8x32xf32> -> vector<8x32xf32>
    %c0_37 = arith.constant 0 : index
    %c0_38 = arith.constant 0 : index
    %90 = vector.load %arg8[%c0_37, %c0_38] : memref<1x32xf32, #tpu.memory_space<vmem>>, vector<1x32xf32>
    %91 = vector.broadcast %90 : vector<1x32xf32> to vector<8x32xf32>
    %92 = arith.addf %89, %91 : vector<8x32xf32>
    %c0_39 = arith.constant 0 : index
    %c0_40 = arith.constant 0 : index
    %c0_41 = arith.constant 0 : index
    %93 = vector.load %arg9[%c0_39, %c0_40, %c0_41] : memref<1x8x32xf32, #tpu.memory_space<vmem>>, vector<1x8x32xf32>
    %94 = vector.shape_cast %93 : vector<1x8x32xf32> to vector<8x32xf32>
    %95 = vector.shape_cast %92 : vector<8x32xf32> to vector<1x8x32xf32>
    tpu.vector_store %arg9[%c0_39, %c0_40, %c0_41], %95 {strides = array<i32>} : memref<1x8x32xf32, #tpu.memory_space<vmem>>, vector<1x8x32xf32>,
    return
  }
  func.func @transform_0(%arg0: i32, %arg1: i32) -> (i32, i32, i32) {
    %c0_i32 = arith.constant 0 : i32
    %c0_i32_0 = arith.constant 0 : i32
    %c0_i32_1 = arith.constant 0 : i32
    return %arg0, %c0_i32, %c0_i32_0 : i32, i32, i32
  }
  func.func @transform_1(%arg0: i32, %arg1: i32) -> (i32, i32) {
    %c0_i32 = arith.constant 0 : i32
    %c0_i32_0 = arith.constant 0 : i32
    %c0_i32_1 = arith.constant 0 : i32
    return %c0_i32, %c0_i32_0 : i32, i32
  }
  func.func @transform_2(%arg0: i32, %arg1: i32) -> (i32, i32) {
    %c0_i32 = arith.constant 0 : i32
    %c0_i32_0 = arith.constant 0 : i32
    %c0_i32_1 = arith.constant 0 : i32
    return %c0_i32, %c0_i32_0 : i32, i32
  }
  func.func @transform_3(%arg0: i32, %arg1: i32) -> (i32, i32) {
    %c0_i32 = arith.constant 0 : i32
    %c0_i32_0 = arith.constant 0 : i32
    %c0_i32_1 = arith.constant 0 : i32
    return %c0_i32, %c0_i32_0 : i32, i32
  }
  func.func @transform_4(%arg0: i32, %arg1: i32) -> (i32, i32) {
    %c0_i32 = arith.constant 0 : i32
    %c0_i32_0 = arith.constant 0 : i32
    %c0_i32_1 = arith.constant 0 : i32
    return %c0_i32, %c0_i32_0 : i32, i32
  }
  func.func @transform_5(%arg0: i32, %arg1: i32) -> (i32, i32) {
    %c0_i32 = arith.constant 0 : i32
    %c0_i32_0 = arith.constant 0 : i32
    %c0_i32_1 = arith.constant 0 : i32
    return %c0_i32, %c0_i32_0 : i32, i32
  }
  func.func @transform_6(%arg0: i32, %arg1: i32) -> (i32, i32) {
    %c0_i32 = arith.constant 0 : i32
    %c0_i32_0 = arith.constant 0 : i32
    %c0_i32_1 = arith.constant 0 : i32
    return %c0_i32, %c0_i32_0 : i32, i32
  }
  func.func @transform_7(%arg0: i32, %arg1: i32) -> (i32, i32, i32) {
    %c0_i32 = arith.constant 0 : i32
    %c0_i32_0 = arith.constant 0 : i32
    return %arg0, %arg1, %c0_i32 : i32, i32, i32
  }
}

</mosaic_0001>

<llo_original>
// kernel: tpu_custom_call.1
$region0: #{tpu_custom_call.1}
  #allocation0 [shape = 'u32[]', space=smem, size = 0x4, offset = 0x4, fixed_abs, tag = 'smem constant byte address 0x4 - core index']
  #allocation1 [shape = 'u32[144,128]{1,0:T(1,128)}', space=vmem, size = 0x12000, scoped, tag = 'internal scratch']
  #allocation2 [shape = 'f32[8,32]{1,0:T(8,128)}', space=vmem, size = 0x1000, scoped, tag = 'scratch operand']
  %s0 = inlined_call_operand.hbm [shape: f32[2,8,32], index: 0, kind: input, shape index: {}]
  %s1 = inlined_call_operand.hbm [shape: bf16[32,32], index: 1, kind: input, shape index: {}]
  %s2 = inlined_call_operand.vmem [shape: f32[1,32], index: 2, kind: input, shape index: {}]
  %s3 = inlined_call_operand.hbm [shape: bf16[32,64], index: 3, kind: input, shape index: {}]
  %s4 = inlined_call_operand.vmem [shape: f32[1,64], index: 4, kind: input, shape index: {}]
  %s5 = inlined_call_operand.vmem [shape: bf16[32,32], index: 5, kind: input, shape index: {}]
  %s6 = inlined_call_operand.vmem [shape: f32[1,32], index: 6, kind: input, shape index: {}]
  %s7 = inlined_call_operand.hbm [shape: f32[2,8,32], index: 7, kind: output, shape index: {}]
  %s8 = sld [smem:[#allocation0]]
  $region73: #{tpu_custom_call.1} parent=0
    _
  %s10 = ssub.s32 1, %s8
  %s11 = scalar_select 0, %s10, %s8
  $region1: #{tpu_custom_call.1} parent=0
    #allocation3 [shape = 'u8[8192]{0}', space=vmem, size = 0x2000, scoped, tag = 'input window, operand 0']
    #allocation4 [shape = 's32[2]{0}', space=sflag, size = 0x8, scoped, tag = 'scoped memory for tpu_custom_call.1']
    #allocation5 [shape = 's32[2]{0}', space=sflag, size = 0x8, scoped, tag = 'scoped memory for tpu_custom_call.1']
    #allocation6 [shape = 'u8[8192]{0}', space=vmem, size = 0x2000, scoped, tag = 'input window, operand 1, single buffered']
    #allocation7 [shape = 's32[1]{0}', space=sflag, size = 0x4, scoped, tag = 'scoped memory for tpu_custom_call.1']
    #allocation8 [shape = 'u8[8192]{0}', space=vmem, size = 0x2000, scoped, tag = 'input window, operand 3, single buffered']
    #allocation9 [shape = 'u8[8192]{0}', space=vmem, size = 0x2000, scoped, tag = 'output window, operand 0']
    %12 = vsyncpa [#allocation4], 0
    %s13 = scalar_lea.sflag [#allocation4], 1
    %14 = vsyncpa %s13, 0
    %15 = vsyncpa [#allocation7], 0
    %16 = vsyncpa [#allocation5], 0
    %s17 = scalar_lea.sflag [#allocation5], 1
    %18 = vsyncpa %s17, 0
    loop: start=0, step=1, limit=4
    $region2: #{tpu_custom_call.1} parent=1 // loop_pre_header
      _
    $region3: #{tpu_custom_call.1} parent=1 // loop_header
      %s20 = sphi 0, %s24
      %p21 = scmp.ge.s32.totalorder %s20, 4
      %s27 = sphi 0, %s39
      %s28 = sphi 0, %s35
      %s29 = sphi 0, %s27
      %s30 = sphi 0, %s28
      %s31 = sphi 0, %s29
      %s32 = sphi 0, %s30
      %s42 = sphi 0, %s44
      %s45 = sphi 0, %s42
      %s46 = sphi 0, %s45
      %s62 = sphi 0, %s46
      %s66 = sphi 0, %s66
      %s68 = sphi 0, %s66
      %s69 = sphi 0, %s68
      %s83 = sphi 0, %s69
      %s87 = sphi 0, %s87
      %s89 = sphi 0, %s87
      %s90 = sphi 0, %s89
      %s104 = sphi 0, %s90
      %s108 = sphi 0, %s108
      %s110 = sphi 0, %s108
      %s111 = sphi 0, %s110
      %s125 = sphi 0, %s111
      %s129 = sphi 0, %s129
      %s131 = sphi 0, %s129
      %s132 = sphi 0, %s131
      %s146 = sphi 0, %s132
      %s150 = sphi 0, %s150
      %s152 = sphi 0, %s150
      %s153 = sphi 0, %s152
      %s167 = sphi 0, %s153
      %s171 = sphi 0, %s171
      %s173 = sphi 0, %s171
      %s174 = sphi 0, %s173
      %s188 = sphi 0, %s174
      %s196 = sphi 0, %s198
      %s199 = sphi 0, %s196
      %s200 = sphi 0, %s199
      %s216 = sphi 0, %s200
    $region4: #{tpu_custom_call.1} parent=1 // loop_header_branch
      %23 = sbr.rel (%p21) target = $region8
    $region5: #{tpu_custom_call.1} parent=1 // loop_body
      %s25 = ssub.s32 %s20, 1
      %s26 = ssub.s32 %s20, 2
      %s33 = sadd.s32 1, %s28
      %p34 = scmp.ge.s32.totalorder %s33, 1
      %s35 = scalar_select %p34, 0, %s33
      %s36 = sadd.s32 1, %s27
      %s37 = scalar_select %p34, %s36, %s27
      %p38 = scmp.ge.s32.totalorder %s37, 2
      %s39 = scalar_select %p38, 0, %s37
      %s40 = ssub.s32 %s27, %s39
      %p41 = scmp.eq.s32.totalorder %s40, 0
      %s43 = sadd.s32 %s42, 1
      %s44 = scalar_select %p41, %s42, %s43
      %p47 = pneg %p41
      %p48 = scmp.eq.s32.totalorder %s20, 1
      %p49 = por %p47, %p48
      %p50 = scmp.ne.s32.totalorder %s42, %s45
      %p51 = scmp.eq.s32.totalorder %s20, 0
      %p52 = por %p50, %p51
      %p53 = scmp.ne.s32.totalorder %s42, %s45
      %p54 = scmp.eq.s32.totalorder %s25, 1
      %p55 = por %p53, %p54
      %p56 = scmp.ne.s32.totalorder %s45, %s46
      %p57 = scmp.eq.s32.totalorder %s25, 0
      %p58 = por %p56, %p57
      %p59 = scmp.ne.s32.totalorder %s45, %s46
      %p60 = scmp.eq.s32.totalorder %s26, 1
      %p61 = por %p59, %p60
      %p63 = scmp.ne.s32.totalorder %s46, %s62
      %p64 = scmp.eq.s32.totalorder %s26, 0
      %p65 = por %p63, %p64
      %s67 = sadd.s32 %s66, 1
      %p70 = scmp.eq.s32.totalorder %s20, 1
      %p71 = scmp.ne.s32.totalorder %s66, %s68
      %p72 = scmp.eq.s32.totalorder %s20, 0
      %p73 = por %p71, %p72
      %p74 = scmp.ne.s32.totalorder %s66, %s68
      %p75 = scmp.eq.s32.totalorder %s25, 1
      %p76 = por %p74, %p75
      %p77 = scmp.ne.s32.totalorder %s68, %s69
      %p78 = scmp.eq.s32.totalorder %s25, 0
      %p79 = por %p77, %p78
      %p80 = scmp.ne.s32.totalorder %s68, %s69
      %p81 = scmp.eq.s32.totalorder %s26, 1
      %p82 = por %p80, %p81
      %p84 = scmp.ne.s32.totalorder %s69, %s83
      %p85 = scmp.eq.s32.totalorder %s26, 0
      %p86 = por %p84, %p85
      %s88 = sadd.s32 %s87, 1
      %p91 = scmp.eq.s32.totalorder %s20, 1
      %p92 = scmp.ne.s32.totalorder %s87, %s89
      %p93 = scmp.eq.s32.totalorder %s20, 0
      %p94 = por %p92, %p93
      %p95 = scmp.ne.s32.totalorder %s87, %s89
      %p96 = scmp.eq.s32.totalorder %s25, 1
      %p97 = por %p95, %p96
      %p98 = scmp.ne.s32.totalorder %s89, %s90
      %p99 = scmp.eq.s32.totalorder %s25, 0
      %p100 = por %p98, %p99
      %p101 = scmp.ne.s32.totalorder %s89, %s90
      %p102 = scmp.eq.s32.totalorder %s26, 1
      %p103 = por %p101, %p102
      %p105 = scmp.ne.s32.totalorder %s90, %s104
      %p106 = scmp.eq.s32.totalorder %s26, 0
      %p107 = por %p105, %p106
      %s109 = sadd.s32 %s108, 1
      %p112 = scmp.eq.s32.totalorder %s20, 1
      %p113 = scmp.ne.s32.totalorder %s108, %s110
      %p114 = scmp.eq.s32.totalorder %s20, 0
      %p115 = por %p113, %p114
      %p116 = scmp.ne.s32.totalorder %s108, %s110
      %p117 = scmp.eq.s32.totalorder %s25, 1
      %p118 = por %p116, %p117
      %p119 = scmp.ne.s32.totalorder %s110, %s111
      %p120 = scmp.eq.s32.totalorder %s25, 0
      %p121 = por %p119, %p120
      %p122 = scmp.ne.s32.totalorder %s110, %s111
      %p123 = scmp.eq.s32.totalorder %s26, 1
      %p124 = por %p122, %p123
      %p126 = scmp.ne.s32.totalorder %s111, %s125
      %p127 = scmp.eq.s32.totalorder %s26, 0
      %p128 = por %p126, %p127
      %s130 = sadd.s32 %s129, 1
      %p133 = scmp.eq.s32.totalorder %s20, 1
      %p134 = scmp.ne.s32.totalorder %s129, %s131
      %p135 = scmp.eq.s32.totalorder %s20, 0
      %p136 = por %p134, %p135
      %p137 = scmp.ne.s32.totalorder %s129, %s131
      %p138 = scmp.eq.s32.totalorder %s25, 1
      %p139 = por %p137, %p138
      %p140 = scmp.ne.s32.totalorder %s131, %s132
      %p141 = scmp.eq.s32.totalorder %s25, 0
      %p142 = por %p140, %p141
      %p143 = scmp.ne.s32.totalorder %s131, %s132
      %p144 = scmp.eq.s32.totalorder %s26, 1
      %p145 = por %p143, %p144
      %p147 = scmp.ne.s32.totalorder %s132, %s146
      %p148 = scmp.eq.s32.totalorder %s26, 0
      %p149 = por %p147, %p148
      %s151 = sadd.s32 %s150, 1
      %p154 = scmp.eq.s32.totalorder %s20, 1
      %p155 = scmp.ne.s32.totalorder %s150, %s152
      %p156 = scmp.eq.s32.totalorder %s20, 0
      %p157 = por %p155, %p156
      %p158 = scmp.ne.s32.totalorder %s150, %s152
      %p159 = scmp.eq.s32.totalorder %s25, 1
      %p160 = por %p158, %p159
      %p161 = scmp.ne.s32.totalorder %s152, %s153
      %p162 = scmp.eq.s32.totalorder %s25, 0
      %p163 = por %p161, %p162
      %p164 = scmp.ne.s32.totalorder %s152, %s153
      %p165 = scmp.eq.s32.totalorder %s26, 1
      %p166 = por %p164, %p165
      %p168 = scmp.ne.s32.totalorder %s153, %s167
      %p169 = scmp.eq.s32.totalorder %s26, 0
      %p170 = por %p168, %p169
      %s172 = sadd.s32 %s171, 1
      %p175 = scmp.eq.s32.totalorder %s20, 1
      %p176 = scmp.ne.s32.totalorder %s171, %s173
      %p177 = scmp.eq.s32.totalorder %s20, 0
      %p178 = por %p176, %p177
      %p179 = scmp.ne.s32.totalorder %s171, %s173
      %p180 = scmp.eq.s32.totalorder %s25, 1
      %p181 = por %p179, %p180
      %p182 = scmp.ne.s32.totalorder %s173, %s174
      %p183 = scmp.eq.s32.totalorder %s25, 0
      %p184 = por %p182, %p183
      %p185 = scmp.ne.s32.totalorder %s173, %s174
      %p186 = scmp.eq.s32.totalorder %s26, 1
      %p187 = por %p185, %p186
      %p189 = scmp.ne.s32.totalorder %s174, %s188
      %p190 = scmp.eq.s32.totalorder %s26, 0
      %p191 = por %p189, %p190
      %s192 = ssub.s32 %s27, %s39
      %s193 = ssub.s32 %s28, %s35
      %s194 = sor.u32 %s192, %s193
      %p195 = scmp.eq.s32.totalorder %s194, 0
      %s197 = sadd.s32 %s196, 1
      %s198 = scalar_select %p195, %s196, %s197
      %p201 = pneg %p195
      %p202 = scmp.eq.s32.totalorder %s20, 1
      %p203 = por %p201, %p202
      %p204 = scmp.ne.s32.totalorder %s196, %s199
      %p205 = scmp.eq.s32.totalorder %s20, 0
      %p206 = por %p204, %p205
      %p207 = scmp.ne.s32.totalorder %s196, %s199
      %p208 = scmp.eq.s32.totalorder %s25, 1
      %p209 = por %p207, %p208
      %p210 = scmp.ne.s32.totalorder %s199, %s200
      %p211 = scmp.eq.s32.totalorder %s25, 0
      %p212 = por %p210, %p211
      %p213 = scmp.ne.s32.totalorder %s199, %s200
      %p214 = scmp.eq.s32.totalorder %s26, 1
      %p215 = por %p213, %p214
      %p217 = scmp.ne.s32.totalorder %s200, %s216
      %p218 = scmp.eq.s32.totalorder %s26, 0
      %p219 = por %p217, %p218
      %p220 = scmp.le.s32.totalorder 1, %s20
      %p221 = scmp.lt.s32.totalorder %s20, 3
      %p222 = pnand %p220, %p221
      %p223 = pneg %p222
      // Predicated region
      $region9: #{tpu_custom_call.1} parent=5 // pred_check
        _
      $region10: #{tpu_custom_call.1} parent=5 // pred_check_branch
        %225 = sbr.rel (%p222) target = $region12
      $region11: #{tpu_custom_call.1} parent=5 // pred_region
        %s226 = ssub.s32 %s20, 1
        // Predicated region
        $region13: #{tpu_custom_call.1} parent=11 // pred_check
          %p227 = pneg %p79
        $region14: #{tpu_custom_call.1} parent=11 // pred_check_branch
          %229 = sbr.rel (%p227) target = $region16
        $region15: #{tpu_custom_call.1} parent=11 // pred_region
          %s231 = ssub.s32 256, 256
          %232 = vsyncadd [#allocation7], %s231
          %s233 = sshll.u32 [#allocation6], 4
          %s234 = int_to_ptr.vmem [resolvable:$true] %s233
          %239 = dma.hbm_to_vmem [thread:$0]  %s1, 256, %s234, [#allocation7], 64, 64, 4
        $region16: #{tpu_custom_call.1} parent=11 // pred_fallthru
          _
        // Predicated region
        $region17: #{tpu_custom_call.1} parent=11 // pred_check
          %p240 = pneg %p100
        $region18: #{tpu_custom_call.1} parent=11 // pred_check_branch
          %242 = sbr.rel (%p240) target = $region20
        $region19: #{tpu_custom_call.1} parent=11 // pred_region
          _
        $region20: #{tpu_custom_call.1} parent=11 // pred_fallthru
          _
        // Predicated region
        $region21: #{tpu_custom_call.1} parent=11 // pred_check
          %p243 = pneg %p121
        $region22: #{tpu_custom_call.1} parent=11 // pred_check_branch
          %245 = sbr.rel (%p243) target = $region24
        $region23: #{tpu_custom_call.1} parent=11 // pred_region
          %s247 = ssub.s32 256, 256
          %248 = vsyncadd [#allocation7], %s247
          %s249 = sshll.u32 [#allocation8], 4
          %s250 = int_to_ptr.vmem [resolvable:$true] %s249
          %255 = dma.hbm_to_vmem [thread:$0]  %s3, 256, %s250, [#allocation7], 64, 64, 4
        $region24: #{tpu_custom_call.1} parent=11 // pred_fallthru
          _
        // Predicated region
        $region25: #{tpu_custom_call.1} parent=11 // pred_check
          %p256 = pneg %p142
        $region26: #{tpu_custom_call.1} parent=11 // pred_check_branch
          %258 = sbr.rel (%p256) target = $region28
        $region27: #{tpu_custom_call.1} parent=11 // pred_region
          _
        $region28: #{tpu_custom_call.1} parent=11 // pred_fallthru
          _
        // Predicated region
        $region29: #{tpu_custom_call.1} parent=11 // pred_check
          %p259 = pneg %p163
        $region30: #{tpu_custom_call.1} parent=11 // pred_check_branch
          %261 = sbr.rel (%p259) target = $region32
        $region31: #{tpu_custom_call.1} parent=11 // pred_region
          _
        $region32: #{tpu_custom_call.1} parent=11 // pred_fallthru
          _
        // Predicated region
        $region33: #{tpu_custom_call.1} parent=11 // pred_check
          %p262 = pneg %p184
        $region34: #{tpu_custom_call.1} parent=11 // pred_check_branch
          %264 = sbr.rel (%p262) target = $region36
        $region35: #{tpu_custom_call.1} parent=11 // pred_region
          _
        $region36: #{tpu_custom_call.1} parent=11 // pred_fallthru
          _
      $region12: #{tpu_custom_call.1} parent=5 // pred_fallthru
        _
      %p265 = scmp.lt.s32.totalorder %s20, 2
      // Predicated region
      $region37: #{tpu_custom_call.1} parent=5 // pred_check
        %p266 = pneg %p265
      $region38: #{tpu_custom_call.1} parent=5 // pred_check_branch
        %268 = sbr.rel (%p266) target = $region40
      $region39: #{tpu_custom_call.1} parent=5 // pred_region
        // Predicated region
        $region41: #{tpu_custom_call.1} parent=39 // pred_check
          %p269 = pneg %p52
        $region42: #{tpu_custom_call.1} parent=39 // pred_check_branch
          %271 = sbr.rel (%p269) target = $region44
        $region43: #{tpu_custom_call.1} parent=39 // pred_region
          %s272 = sand.u32 %s42, 1
          %s273 = scalar_lea.sflag [#allocation4], %s272
          %s274 = sand.u32 %s42, 1
          %s275 = smul.addr %s274, 8
          %s276 = scalar_lea.vmem [#allocation3], %s275
          %s278 = ssub.s32 128, 128
          %279 = vsyncadd %s273, %s278
          %s280 = smul.addr %s27, 128
          %s281 = scalar_lea.hbm %s0, %s280
          %s283 = sshll.u32 %s276, 4
          %s284 = int_to_ptr.vmem [resolvable:$true] %s283
          %286 = dma.hbm_to_vmem [thread:$0]  %s281, 128, %s284, %s273
        $region44: #{tpu_custom_call.1} parent=39 // pred_fallthru
          _
      $region40: #{tpu_custom_call.1} parent=5 // pred_fallthru
        _
      %p287 = scmp.le.s32.totalorder 1, %s20
      %p288 = scmp.lt.s32.totalorder %s20, 3
      %p289 = pnand %p287, %p288
      %p290 = pneg %p289
      // Predicated region
      $region45: #{tpu_custom_call.1} parent=5 // pred_check
        _
      $region46: #{tpu_custom_call.1} parent=5 // pred_check_branch
        %292 = sbr.rel (%p289) target = $region48
      $region47: #{tpu_custom_call.1} parent=5 // pred_region
        %s293 = ssub.s32 %s20, 1
        %s294 = sand.u32 %s45, 1
        %s295 = scalar_lea.sflag [#allocation4], %s294
        %s296 = sand.u32 %s45, 1
        %s297 = smul.addr %s296, 8
        %s298 = scalar_lea.vmem [#allocation3], %s297
        // Predicated region
        $region49: #{tpu_custom_call.1} parent=47 // pred_check
          %p299 = pneg %p58
        $region50: #{tpu_custom_call.1} parent=47 // pred_check_branch
          %301 = sbr.rel (%p299) target = $region52
        $region51: #{tpu_custom_call.1} parent=47 // pred_region
          %302 = dma.done %s295, 128
        $region52: #{tpu_custom_call.1} parent=47 // pred_fallthru
          _
        // Predicated region
        $region53: #{tpu_custom_call.1} parent=47 // pred_check
          %p303 = pneg %p79
        $region54: #{tpu_custom_call.1} parent=47 // pred_check_branch
          %305 = sbr.rel (%p303) target = $region56
        $region55: #{tpu_custom_call.1} parent=47 // pred_region
          %306 = dma.done [#allocation7], 256
        $region56: #{tpu_custom_call.1} parent=47 // pred_fallthru
          _
        // Predicated region
        $region57: #{tpu_custom_call.1} parent=47 // pred_check
          %p307 = pneg %p121
        $region58: #{tpu_custom_call.1} parent=47 // pred_check_branch
          %309 = sbr.rel (%p307) target = $region60
        $region59: #{tpu_custom_call.1} parent=47 // pred_region
          %310 = dma.done [#allocation7], 256
        $region60: #{tpu_custom_call.1} parent=47 // pred_fallthru
          _
        %s311 = sand.u32 %s45, 1
        %s312 = scalar_lea.sflag [#allocation4], %s311
        %s313 = sand.u32 %s45, 1
        %s314 = smul.addr %s313, 8
        %s315 = scalar_lea.vmem [#allocation3], %s314
        %p316 = pneg %p58
        %p317 = pneg %p55
        %p318 = pneg %p79
        %p319 = pneg %p76
        %p320 = pneg %p100
        %p321 = pneg %p97
        %p322 = pneg %p121
        %p323 = pneg %p118
        %p324 = pneg %p142
        %p325 = pneg %p139
        %p326 = pneg %p163
        %p327 = pneg %p160
        %p328 = pneg %p184
        %p329 = pneg %p181
        %p330 = pneg %p212
        %p331 = pneg %p209
        %s332 = sand.u32 %s199, 1
        %s333 = scalar_lea.sflag [#allocation5], %s332
        %s334 = sand.u32 %s199, 1
        %s335 = smul.addr %s334, 8
        %s336 = scalar_lea.vmem [#allocation9], %s335
        %v338 = vld [vmem:[%s298] sm:$0xff]
        %v339 = vpack.c.bf16 %v338, %v338
        %v340 = vld [vmem:[#allocation6] sm:$0xf]
        %v341 = vld [vmem:[#allocation6 + $0x4] sm:$0xf]
        %v342 = vld [vmem:[#allocation6 + $0x8] sm:$0xf]
        %v343 = vld [vmem:[#allocation6 + $0xc] sm:$0xf]
        %v344 = vld [vmem:[%s2] sm:$0x1]
        %v346 = vlaneseq
        %v347 = vshrl.u32 %v346, 7
        %v348 = vsub.s32 0, %v347
        %v349 = vrot.slane %v344, %v348
        %v355 = vunpack.c.l.b16 %v340
        %v356 = vunpack.c.l.b16 %v341
        %v357 = vunpack.c.l.b16 %v342
        %v358 = vunpack.c.l.b16 %v343
        %v359 = vpack.c.b16 %v356, %v355
        %v360 = vpack.c.b16 %v358, %v357
        %vm363 = vcmask 261120
        %v365 = vsel %vm363, %v339, 0
        %367 = vmatprep.subr.bf16.mxu0 0
        %368 = vmatpush1.bf16.msra.mxu0 %v359
        %369 = vmatprep.subr.bf16.mxu0 0
        %370 = vmatpush1.bf16.msra.mxu0 %v360
        %371 = vmatprep.subr.bf16.mxu0 0
        %372 = vmatpush1.bf16.msra.mxu0 0
        %373 = vmatprep.subr.bf16.mxu0 0
        %374 = vmatpush1.bf16.msra.mxu0 0
        %375 = vmatprep.subr.bf16.mxu0 0
        %376 = vmatpush1.bf16.msra.mxu0 0
        %377 = vmatprep.subr.bf16.mxu0 0
        %378 = vmatpush1.bf16.msra.mxu0 0
        %379 = vmatprep.subr.bf16.mxu0 0
        %380 = vmatpush1.bf16.msra.mxu0 0
        %381 = vmatprep.subr.bf16.mxu0 0
        %382 = vmatpush1.bf16.msra.mxu0 0
        %383 = vmatprep.subr.bf16.mxu0 0
        %384 = vmatpush1.bf16.msra.mxu0 0
        %385 = vmatprep.subr.bf16.mxu0 0
        %386 = vmatpush1.bf16.msra.mxu0 0
        %387 = vmatprep.subr.bf16.mxu0 0
        %388 = vmatpush1.bf16.msra.mxu0 0
        %389 = vmatprep.subr.bf16.mxu0 0
        %390 = vmatpush1.bf16.msra.mxu0 0
        %391 = vmatprep.subr.bf16.mxu0 0
        %392 = vmatpush1.bf16.msra.mxu0 0
        %393 = vmatprep.subr.bf16.mxu0 0
        %394 = vmatpush1.bf16.msra.mxu0 0
        %395 = vmatprep.subr.bf16.mxu0 0
        %396 = vmatpush1.bf16.msra.mxu0 0
        %397 = vmatprep.subr.bf16.mxu0 0
        %398 = vmatpush1.bf16.msra.mxu0 0
        %399 = vmatprep.mubr.bf16.mxu0 0
        %400 = vmatmul.mubr.bf16.gmra.mrb[0].mxu0 %v365
        %v401 = vpop.f32.mrb[0].mxu0
        %v402 = vadd.f32 %v349, %v401
        %v403 = vpop.f32.mrb[0].mxu0
        %v404 = vpop.f32.mrb[0].mxu0
        %v405 = vpop.f32.mrb[0].mxu0
        %406 = vdwg.mxu0
        %v407 = vld [vmem:[#allocation8] sm:$0xf]
        %v408 = vld [vmem:[#allocation8 + $0x4] sm:$0xf]
        %v409 = vld [vmem:[#allocation8 + $0x8] sm:$0xf]
        %v410 = vld [vmem:[#allocation8 + $0xc] sm:$0xf]
        %v411 = vld [vmem:[%s4] sm:$0x1]
        %v413 = vlaneseq
        %v414 = vshrl.u32 %v413, 7
        %v415 = vsub.s32 0, %v414
        %v416 = vrot.slane %v411, %v415
        %v422 = vunpack.c.l.b16 %v407
        %v423 = vunpack.c.l.b16 %v408
        %v424 = vunpack.c.l.b16 %v409
        %v425 = vunpack.c.l.b16 %v410
        %v426 = vpack.c.b16 %v423, %v422
        %v427 = vpack.c.b16 %v425, %v424
        %430 = vmatprep.subr.bf16.mxu0 0
        %431 = vmatpush1.bf16.msra.mxu0 %v426
        %432 = vmatprep.subr.bf16.mxu0 0
        %433 = vmatpush1.bf16.msra.mxu0 %v427
        %434 = vmatprep.subr.bf16.mxu0 0
        %435 = vmatpush1.bf16.msra.mxu0 0
        %436 = vmatprep.subr.bf16.mxu0 0
        %437 = vmatpush1.bf16.msra.mxu0 0
        %438 = vmatprep.subr.bf16.mxu0 0
        %439 = vmatpush1.bf16.msra.mxu0 0
        %440 = vmatprep.subr.bf16.mxu0 0
        %441 = vmatpush1.bf16.msra.mxu0 0
        %442 = vmatprep.subr.bf16.mxu0 0
        %443 = vmatpush1.bf16.msra.mxu0 0
        %444 = vmatprep.subr.bf16.mxu0 0
        %445 = vmatpush1.bf16.msra.mxu0 0
        %446 = vmatprep.subr.bf16.mxu0 0
        %447 = vmatpush1.bf16.msra.mxu0 0
        %448 = vmatprep.subr.bf16.mxu0 0
        %449 = vmatpush1.bf16.msra.mxu0 0
        %450 = vmatprep.subr.bf16.mxu0 0
        %451 = vmatpush1.bf16.msra.mxu0 0
        %452 = vmatprep.subr.bf16.mxu0 0
        %453 = vmatpush1.bf16.msra.mxu0 0
        %454 = vmatprep.subr.bf16.mxu0 0
        %455 = vmatpush1.bf16.msra.mxu0 0
        %456 = vmatprep.subr.bf16.mxu0 0
        %457 = vmatpush1.bf16.msra.mxu0 0
        %458 = vmatprep.subr.bf16.mxu0 0
        %459 = vmatpush1.bf16.msra.mxu0 0
        %460 = vmatprep.subr.bf16.mxu0 0
        %461 = vmatpush1.bf16.msra.mxu0 0
        %462 = vmatprep.mubr.bf16.mxu0 0
        %463 = vmatmul.mubr.bf16.gmra.mrb[0].mxu0 %v365
        %v464 = vpop.f32.mrb[0].mxu0
        %v465 = vadd.f32 %v416, %v464
        %v466 = vpop.f32.mrb[0].mxu0
        %v467 = vpop.f32.mrb[0].mxu0
        %v468 = vpop.f32.mrb[0].mxu0
        %469 = vdwg.mxu0
        %v470 = vpack.c.bf16 %v402, %v402
        %v471 = vpack.c.bf16 %v465, %v465
        %vm472 = vcmask 64512
        %v474 = vsel %vm472, %v470, 0
        %v477 = vsel %vm472, %v471, 0
        %479 = vmatprep.subr.bf16.mxu0 0
        %480 = vmatpush1.bf16.xpose.msra.mxu0 %v477
        %481 = vmatprep.subr.bf16.mxu0 0
        %482 = vmatpush1.bf16.xpose.msra.mxu0 0
        %483 = vmatprep.subr.bf16.mxu0 0
        %484 = vmatpush1.bf16.xpose.msra.mxu0 0
        %485 = vmatprep.subr.bf16.mxu0 0
        %486 = vmatpush1.bf16.xpose.msra.mxu0 0
        %487 = vmatprep.subr.bf16.mxu0 0
        %488 = vmatpush1.bf16.xpose.msra.mxu0 0
        %489 = vmatprep.subr.bf16.mxu0 0
        %490 = vmatpush1.bf16.xpose.msra.mxu0 0
        %491 = vmatprep.subr.bf16.mxu0 0
        %492 = vmatpush1.bf16.xpose.msra.mxu0 0
        %493 = vmatprep.subr.bf16.mxu0 0
        %494 = vmatpush1.bf16.xpose.msra.mxu0 0
        %495 = vmatprep.subr.bf16.mxu0 0
        %496 = vmatpush1.bf16.xpose.msra.mxu0 0
        %497 = vmatprep.subr.bf16.mxu0 0
        %498 = vmatpush1.bf16.xpose.msra.mxu0 0
        %499 = vmatprep.subr.bf16.mxu0 0
        %500 = vmatpush1.bf16.xpose.msra.mxu0 0
        %501 = vmatprep.subr.bf16.mxu0 0
        %502 = vmatpush1.bf16.xpose.msra.mxu0 0
        %503 = vmatprep.subr.bf16.mxu0 0
        %504 = vmatpush1.bf16.xpose.msra.mxu0 0
        %505 = vmatprep.subr.bf16.mxu0 0
        %506 = vmatpush1.bf16.xpose.msra.mxu0 0
        %507 = vmatprep.subr.bf16.mxu0 0
        %508 = vmatpush1.bf16.xpose.msra.mxu0 0
        %509 = vmatprep.subr.bf16.mxu0 0
        %510 = vmatpush1.bf16.xpose.msra.mxu0 0
        %511 = vmatprep.mubr.bf16.mxu0 0
        %512 = vmatmul.mubr.bf16.gmra.mrb[0].mxu0 %v474
        %v513 = vpop.f32.mrb[0].mxu0
        %v514 = vadd.f32 0.0, %v513
        %v515 = vpop.f32.mrb[0].mxu0
        %v516 = vpop.f32.mrb[0].mxu0
        %v517 = vpop.f32.mrb[0].mxu0
        %518 = vdwg.mxu0
        %v519 = vsel %vm472, %v514, -inf
        %520 = vmax.xlane.f32.xlu0 %v519
        %v521 = vpop.xlane.xlu0 %520
        %v522 = vsub.f32 %v514, %v521
        %v523 = vmul.f32 %v522, 1.442695
        %v524 = vpow.pop %v523
        %v525 = vsel %vm472, %v524, 0.0
        %526 = vadd.xlane.f32.xlu0 %v525
        %v527 = vpop.xlane.xlu0 %526
        %v528 = vrcp.pop %v527
        %v529 = vmul.f32 %v524, %v528
        %v530 = vpack.c.bf16 %v529, %v529
        %532 = vrot.lane.b32.xlu0 %v471, 96
        %v533 = vpop.permute.xlu0 %532
        %v535 = vsel %vm472, %v530, 0
        %vm537 = vcmask 1043456
        %v539 = vsel %vm537, %v533, 0
        %541 = vmatprep.subr.bf16.mxu0 0
        %542 = vmatpush1.bf16.msra.mxu0 %v539
        %543 = vmatprep.subr.bf16.mxu0 0
        %544 = vmatpush1.bf16.msra.mxu0 0
        %545 = vmatprep.subr.bf16.mxu0 0
        %546 = vmatpush1.bf16.msra.mxu0 0
        %547 = vmatprep.subr.bf16.mxu0 0
        %548 = vmatpush1.bf16.msra.mxu0 0
        %549 = vmatprep.subr.bf16.mxu0 0
        %550 = vmatpush1.bf16.msra.mxu0 0
        %551 = vmatprep.subr.bf16.mxu0 0
        %552 = vmatpush1.bf16.msra.mxu0 0
        %553 = vmatprep.subr.bf16.mxu0 0
        %554 = vmatpush1.bf16.msra.mxu0 0
        %555 = vmatprep.subr.bf16.mxu0 0
        %556 = vmatpush1.bf16.msra.mxu0 0
        %557 = vmatprep.subr.bf16.mxu0 0
        %558 = vmatpush1.bf16.msra.mxu0 0
        %559 = vmatprep.subr.bf16.mxu0 0
        %560 = vmatpush1.bf16.msra.mxu0 0
        %561 = vmatprep.subr.bf16.mxu0 0
        %562 = vmatpush1.bf16.msra.mxu0 0
        %563 = vmatprep.subr.bf16.mxu0 0
        %564 = vmatpush1.bf16.msra.mxu0 0
        %565 = vmatprep.subr.bf16.mxu0 0
        %566 = vmatpush1.bf16.msra.mxu0 0
        %567 = vmatprep.subr.bf16.mxu0 0
        %568 = vmatpush1.bf16.msra.mxu0 0
        %569 = vmatprep.subr.bf16.mxu0 0
        %570 = vmatpush1.bf16.msra.mxu0 0
        %571 = vmatprep.subr.bf16.mxu0 0
        %572 = vmatpush1.bf16.msra.mxu0 0
        %573 = vmatprep.mubr.bf16.mxu0 0
        %574 = vmatmul.mubr.bf16.gmra.mrb[0].mxu0 %v535
        %v575 = vpop.f32.mrb[0].mxu0
        %v576 = vadd.f32 0.0, %v575
        %v577 = vpop.f32.mrb[0].mxu0
        %v578 = vpop.f32.mrb[0].mxu0
        %v579 = vpop.f32.mrb[0].mxu0
        %580 = vdwg.mxu0
        %581 = vst.msk [vmem:[#allocation2] sm:$0xff] %vm472, %v576
        %583 = vrot.lane.b32.xlu0 %v470, 120
        %v584 = vpop.permute.xlu0 %583
        %585 = vrot.lane.b32.xlu0 %v471, 120
        %v586 = vpop.permute.xlu0 %585
        %v588 = vsel %vm472, %v584, 0
        %v591 = vsel %vm472, %v586, 0
        %593 = vmatprep.subr.bf16.mxu0 0
        %594 = vmatpush1.bf16.xpose.msra.mxu0 %v591
        %595 = vmatprep.subr.bf16.mxu0 0
        %596 = vmatpush1.bf16.xpose.msra.mxu0 0
        %597 = vmatprep.subr.bf16.mxu0 0
        %598 = vmatpush1.bf16.xpose.msra.mxu0 0
        %599 = vmatprep.subr.bf16.mxu0 0
        %600 = vmatpush1.bf16.xpose.msra.mxu0 0
        %601 = vmatprep.subr.bf16.mxu0 0
        %602 = vmatpush1.bf16.xpose.msra.mxu0 0
        %603 = vmatprep.subr.bf16.mxu0 0
        %604 = vmatpush1.bf16.xpose.msra.mxu0 0
        %605 = vmatprep.subr.bf16.mxu0 0
        %606 = vmatpush1.bf16.xpose.msra.mxu0 0
        %607 = vmatprep.subr.bf16.mxu0 0
        %608 = vmatpush1.bf16.xpose.msra.mxu0 0
        %609 = vmatprep.subr.bf16.mxu0 0
        %610 = vmatpush1.bf16.xpose.msra.mxu0 0
        %611 = vmatprep.subr.bf16.mxu0 0
        %612 = vmatpush1.bf16.xpose.msra.mxu0 0
        %613 = vmatprep.subr.bf16.mxu0 0
        %614 = vmatpush1.bf16.xpose.msra.mxu0 0
        %615 = vmatprep.subr.bf16.mxu0 0
        %616 = vmatpush1.bf16.xpose.msra.mxu0 0
        %617 = vmatprep.subr.bf16.mxu0 0
        %618 = vmatpush1.bf16.xpose.msra.mxu0 0
        %619 = vmatprep.subr.bf16.mxu0 0
        %620 = vmatpush1.bf16.xpose.msra.mxu0 0
        %621 = vmatprep.subr.bf16.mxu0 0
        %622 = vmatpush1.bf16.xpose.msra.mxu0 0
        %623 = vmatprep.subr.bf16.mxu0 0
        %624 = vmatpush1.bf16.xpose.msra.mxu0 0
        %625 = vmatprep.mubr.bf16.mxu0 0
        %626 = vmatmul.mubr.bf16.gmra.mrb[0].mxu0 %v588
        %v627 = vpop.f32.mrb[0].mxu0
        %v628 = vadd.f32 0.0, %v627
        %v629 = vpop.f32.mrb[0].mxu0
        %v630 = vpop.f32.mrb[0].mxu0
        %v631 = vpop.f32.mrb[0].mxu0
        %632 = vdwg.mxu0
        %v633 = vsel %vm472, %v628, -inf
        %634 = vmax.xlane.f32.xlu0 %v633
        %v635 = vpop.xlane.xlu0 %634
        %v636 = vsub.f32 %v628, %v635
        %v637 = vmul.f32 %v636, 1.442695
        %v638 = vpow.pop %v637
        %v639 = vsel %vm472, %v638, 0.0
        %640 = vadd.xlane.f32.xlu0 %v639
        %v641 = vpop.xlane.xlu0 %640
        %v642 = vrcp.pop %v641
        %v643 = vmul.f32 %v638, %v642
        %v644 = vpack.c.bf16 %v643, %v643
        %645 = vrot.lane.b32.xlu0 %v471, 88
        %v646 = vpop.permute.xlu0 %645
        %v648 = vsel %vm472, %v644, 0
        %v651 = vsel %vm537, %v646, 0
        %653 = vmatprep.subr.bf16.mxu0 0
        %654 = vmatpush1.bf16.msra.mxu0 %v651
        %655 = vmatprep.subr.bf16.mxu0 0
        %656 = vmatpush1.bf16.msra.mxu0 0
        %657 = vmatprep.subr.bf16.mxu0 0
        %658 = vmatpush1.bf16.msra.mxu0 0
        %659 = vmatprep.subr.bf16.mxu0 0
        %660 = vmatpush1.bf16.msra.mxu0 0
        %661 = vmatprep.subr.bf16.mxu0 0
        %662 = vmatpush1.bf16.msra.mxu0 0
        %663 = vmatprep.subr.bf16.mxu0 0
        %664 = vmatpush1.bf16.msra.mxu0 0
        %665 = vmatprep.subr.bf16.mxu0 0
        %666 = vmatpush1.bf16.msra.mxu0 0
        %667 = vmatprep.subr.bf16.mxu0 0
        %668 = vmatpush1.bf16.msra.mxu0 0
        %669 = vmatprep.subr.bf16.mxu0 0
        %670 = vmatpush1.bf16.msra.mxu0 0
        %671 = vmatprep.subr.bf16.mxu0 0
        %672 = vmatpush1.bf16.msra.mxu0 0
        %673 = vmatprep.subr.bf16.mxu0 0
        %674 = vmatpush1.bf16.msra.mxu0 0
        %675 = vmatprep.subr.bf16.mxu0 0
        %676 = vmatpush1.bf16.msra.mxu0 0
        %677 = vmatprep.subr.bf16.mxu0 0
        %678 = vmatpush1.bf16.msra.mxu0 0
        %679 = vmatprep.subr.bf16.mxu0 0
        %680 = vmatpush1.bf16.msra.mxu0 0
        %681 = vmatprep.subr.bf16.mxu0 0
        %682 = vmatpush1.bf16.msra.mxu0 0
        %683 = vmatprep.subr.bf16.mxu0 0
        %684 = vmatpush1.bf16.msra.mxu0 0
        %685 = vmatprep.mubr.bf16.mxu0 0
        %686 = vmatmul.mubr.bf16.gmra.mrb[0].mxu0 %v648
        %v687 = vpop.f32.mrb[0].mxu0
        %v688 = vadd.f32 0.0, %v687
        %v689 = vpop.f32.mrb[0].mxu0
        %v690 = vpop.f32.mrb[0].mxu0
        %v691 = vpop.f32.mrb[0].mxu0
        %692 = vdwg.mxu0
        %694 = vrot.lane.b32.xlu0 %v688, 8
        %v695 = vpop.permute.xlu0 %694
        %vm697 = vcmask 130112
        %698 = vst.msk [vmem:[#allocation2] sm:$0xff] %vm697, %v695
        %699 = vrot.lane.b32.xlu0 %v470, 112
        %v700 = vpop.permute.xlu0 %699
        %701 = vrot.lane.b32.xlu0 %v471, 112
        %v702 = vpop.permute.xlu0 %701
        %v704 = vsel %vm472, %v700, 0
        %v707 = vsel %vm472, %v702, 0
        %709 = vmatprep.subr.bf16.mxu0 0
        %710 = vmatpush1.bf16.xpose.msra.mxu0 %v707
        %711 = vmatprep.subr.bf16.mxu0 0
        %712 = vmatpush1.bf16.xpose.msra.mxu0 0
        %713 = vmatprep.subr.bf16.mxu0 0
        %714 = vmatpush1.bf16.xpose.msra.mxu0 0
        %715 = vmatprep.subr.bf16.mxu0 0
        %716 = vmatpush1.bf16.xpose.msra.mxu0 0
        %717 = vmatprep.subr.bf16.mxu0 0
        %718 = vmatpush1.bf16.xpose.msra.mxu0 0
        %719 = vmatprep.subr.bf16.mxu0 0
        %720 = vmatpush1.bf16.xpose.msra.mxu0 0
        %721 = vmatprep.subr.bf16.mxu0 0
        %722 = vmatpush1.bf16.xpose.msra.mxu0 0
        %723 = vmatprep.subr.bf16.mxu0 0
        %724 = vmatpush1.bf16.xpose.msra.mxu0 0
        %725 = vmatprep.subr.bf16.mxu0 0
        %726 = vmatpush1.bf16.xpose.msra.mxu0 0
        %727 = vmatprep.subr.bf16.mxu0 0
        %728 = vmatpush1.bf16.xpose.msra.mxu0 0
        %729 = vmatprep.subr.bf16.mxu0 0
        %730 = vmatpush1.bf16.xpose.msra.mxu0 0
        %731 = vmatprep.subr.bf16.mxu0 0
        %732 = vmatpush1.bf16.xpose.msra.mxu0 0
        %733 = vmatprep.subr.bf16.mxu0 0
        %734 = vmatpush1.bf16.xpose.msra.mxu0 0
        %735 = vmatprep.subr.bf16.mxu0 0
        %736 = vmatpush1.bf16.xpose.msra.mxu0 0
        %737 = vmatprep.subr.bf16.mxu0 0
        %738 = vmatpush1.bf16.xpose.msra.mxu0 0
        %739 = vmatprep.subr.bf16.mxu0 0
        %740 = vmatpush1.bf16.xpose.msra.mxu0 0
        %741 = vmatprep.mubr.bf16.mxu0 0
        %742 = vmatmul.mubr.bf16.gmra.mrb[0].mxu0 %v704
        %v743 = vpop.f32.mrb[0].mxu0
        %v744 = vadd.f32 0.0, %v743
        %v745 = vpop.f32.mrb[0].mxu0
        %v746 = vpop.f32.mrb[0].mxu0
        %v747 = vpop.f32.mrb[0].mxu0
        %748 = vdwg.mxu0
        %v749 = vsel %vm472, %v744, -inf
        %750 = vmax.xlane.f32.xlu0 %v749
        %v751 = vpop.xlane.xlu0 %750
        %v752 = vsub.f32 %v744, %v751
        %v753 = vmul.f32 %v752, 1.442695
        %v754 = vpow.pop %v753
        %v755 = vsel %vm472, %v754, 0.0
        %756 = vadd.xlane.f32.xlu0 %v755
        %v757 = vpop.xlane.xlu0 %756
        %v758 = vrcp.pop %v757
        %v759 = vmul.f32 %v754, %v758
        %v760 = vpack.c.bf16 %v759, %v759
        %761 = vrot.lane.b32.xlu0 %v471, 80
        %v762 = vpop.permute.xlu0 %761
        %v764 = vsel %vm472, %v760, 0
        %v767 = vsel %vm537, %v762, 0
        %769 = vmatprep.subr.bf16.mxu0 0
        %770 = vmatpush1.bf16.msra.mxu0 %v767
        %771 = vmatprep.subr.bf16.mxu0 0
        %772 = vmatpush1.bf16.msra.mxu0 0
        %773 = vmatprep.subr.bf16.mxu0 0
        %774 = vmatpush1.bf16.msra.mxu0 0
        %775 = vmatprep.subr.bf16.mxu0 0
        %776 = vmatpush1.bf16.msra.mxu0 0
        %777 = vmatprep.subr.bf16.mxu0 0
        %778 = vmatpush1.bf16.msra.mxu0 0
        %779 = vmatprep.subr.bf16.mxu0 0
        %780 = vmatpush1.bf16.msra.mxu0 0
        %781 = vmatprep.subr.bf16.mxu0 0
        %782 = vmatpush1.bf16.msra.mxu0 0
        %783 = vmatprep.subr.bf16.mxu0 0
        %784 = vmatpush1.bf16.msra.mxu0 0
        %785 = vmatprep.subr.bf16.mxu0 0
        %786 = vmatpush1.bf16.msra.mxu0 0
        %787 = vmatprep.subr.bf16.mxu0 0
        %788 = vmatpush1.bf16.msra.mxu0 0
        %789 = vmatprep.subr.bf16.mxu0 0
        %790 = vmatpush1.bf16.msra.mxu0 0
        %791 = vmatprep.subr.bf16.mxu0 0
        %792 = vmatpush1.bf16.msra.mxu0 0
        %793 = vmatprep.subr.bf16.mxu0 0
        %794 = vmatpush1.bf16.msra.mxu0 0
        %795 = vmatprep.subr.bf16.mxu0 0
        %796 = vmatpush1.bf16.msra.mxu0 0
        %797 = vmatprep.subr.bf16.mxu0 0
        %798 = vmatpush1.bf16.msra.mxu0 0
        %799 = vmatprep.subr.bf16.mxu0 0
        %800 = vmatpush1.bf16.msra.mxu0 0
        %801 = vmatprep.mubr.bf16.mxu0 0
        %802 = vmatmul.mubr.bf16.gmra.mrb[0].mxu0 %v764
        %v803 = vpop.f32.mrb[0].mxu0
        %v804 = vadd.f32 0.0, %v803
        %v805 = vpop.f32.mrb[0].mxu0
        %v806 = vpop.f32.mrb[0].mxu0
        %v807 = vpop.f32.mrb[0].mxu0
        %808 = vdwg.mxu0
        %810 = vrot.lane.b32.xlu0 %v804, 16
        %v811 = vpop.permute.xlu0 %810
        %vm813 = vcmask 195712
        %814 = vst.msk [vmem:[#allocation2] sm:$0xff] %vm813, %v811
        %815 = vrot.lane.b32.xlu0 %v470, 104
        %v816 = vpop.permute.xlu0 %815
        %817 = vrot.lane.b32.xlu0 %v471, 104
        %v818 = vpop.permute.xlu0 %817
        %v820 = vsel %vm472, %v816, 0
        %v823 = vsel %vm472, %v818, 0
        %825 = vmatprep.subr.bf16.mxu0 0
        %826 = vmatpush1.bf16.xpose.msra.mxu0 %v823
        %827 = vmatprep.subr.bf16.mxu0 0
        %828 = vmatpush1.bf16.xpose.msra.mxu0 0
        %829 = vmatprep.subr.bf16.mxu0 0
        %830 = vmatpush1.bf16.xpose.msra.mxu0 0
        %831 = vmatprep.subr.bf16.mxu0 0
        %832 = vmatpush1.bf16.xpose.msra.mxu0 0
        %833 = vmatprep.subr.bf16.mxu0 0
        %834 = vmatpush1.bf16.xpose.msra.mxu0 0
        %835 = vmatprep.subr.bf16.mxu0 0
        %836 = vmatpush1.bf16.xpose.msra.mxu0 0
        %837 = vmatprep.subr.bf16.mxu0 0
        %838 = vmatpush1.bf16.xpose.msra.mxu0 0
        %839 = vmatprep.subr.bf16.mxu0 0
        %840 = vmatpush1.bf16.xpose.msra.mxu0 0
        %841 = vmatprep.subr.bf16.mxu0 0
        %842 = vmatpush1.bf16.xpose.msra.mxu0 0
        %843 = vmatprep.subr.bf16.mxu0 0
        %844 = vmatpush1.bf16.xpose.msra.mxu0 0
        %845 = vmatprep.subr.bf16.mxu0 0
        %846 = vmatpush1.bf16.xpose.msra.mxu0 0
        %847 = vmatprep.subr.bf16.mxu0 0
        %848 = vmatpush1.bf16.xpose.msra.mxu0 0
        %849 = vmatprep.subr.bf16.mxu0 0
        %850 = vmatpush1.bf16.xpose.msra.mxu0 0
        %851 = vmatprep.subr.bf16.mxu0 0
        %852 = vmatpush1.bf16.xpose.msra.mxu0 0
        %853 = vmatprep.subr.bf16.mxu0 0
        %854 = vmatpush1.bf16.xpose.msra.mxu0 0
        %855 = vmatprep.subr.bf16.mxu0 0
        %856 = vmatpush1.bf16.xpose.msra.mxu0 0
        %857 = vmatprep.mubr.bf16.mxu0 0
        %858 = vmatmul.mubr.bf16.gmra.mrb[0].mxu0 %v820
        %v859 = vpop.f32.mrb[0].mxu0
        %v860 = vadd.f32 0.0, %v859
        %v861 = vpop.f32.mrb[0].mxu0
        %v862 = vpop.f32.mrb[0].mxu0
        %v863 = vpop.f32.mrb[0].mxu0
        %864 = vdwg.mxu0
        %v865 = vsel %vm472, %v860, -inf
        %866 = vmax.xlane.f32.xlu0 %v865
        %v867 = vpop.xlane.xlu0 %866
        %v868 = vsub.f32 %v860, %v867
        %v869 = vmul.f32 %v868, 1.442695
        %v870 = vpow.pop %v869
        %v871 = vsel %vm472, %v870, 0.0
        %872 = vadd.xlane.f32.xlu0 %v871
        %v873 = vpop.xlane.xlu0 %872
        %v874 = vrcp.pop %v873
        %v875 = vmul.f32 %v870, %v874
        %v876 = vpack.c.bf16 %v875, %v875
        %877 = vrot.lane.b32.xlu0 %v471, 72
        %v878 = vpop.permute.xlu0 %877
        %v880 = vsel %vm472, %v876, 0
        %v883 = vsel %vm537, %v878, 0
        %885 = vmatprep.subr.bf16.mxu0 0
        %886 = vmatpush1.bf16.msra.mxu0 %v883
        %887 = vmatprep.subr.bf16.mxu0 0
        %888 = vmatpush1.bf16.msra.mxu0 0
        %889 = vmatprep.subr.bf16.mxu0 0
        %890 = vmatpush1.bf16.msra.mxu0 0
        %891 = vmatprep.subr.bf16.mxu0 0
        %892 = vmatpush1.bf16.msra.mxu0 0
        %893 = vmatprep.subr.bf16.mxu0 0
        %894 = vmatpush1.bf16.msra.mxu0 0
        %895 = vmatprep.subr.bf16.mxu0 0
        %896 = vmatpush1.bf16.msra.mxu0 0
        %897 = vmatprep.subr.bf16.mxu0 0
        %898 = vmatpush1.bf16.msra.mxu0 0
        %899 = vmatprep.subr.bf16.mxu0 0
        %900 = vmatpush1.bf16.msra.mxu0 0
        %901 = vmatprep.subr.bf16.mxu0 0
        %902 = vmatpush1.bf16.msra.mxu0 0
        %903 = vmatprep.subr.bf16.mxu0 0
        %904 = vmatpush1.bf16.msra.mxu0 0
        %905 = vmatprep.subr.bf16.mxu0 0
        %906 = vmatpush1.bf16.msra.mxu0 0
        %907 = vmatprep.subr.bf16.mxu0 0
        %908 = vmatpush1.bf16.msra.mxu0 0
        %909 = vmatprep.subr.bf16.mxu0 0
        %910 = vmatpush1.bf16.msra.mxu0 0
        %911 = vmatprep.subr.bf16.mxu0 0
        %912 = vmatpush1.bf16.msra.mxu0 0
        %913 = vmatprep.subr.bf16.mxu0 0
        %914 = vmatpush1.bf16.msra.mxu0 0
        %915 = vmatprep.subr.bf16.mxu0 0
        %916 = vmatpush1.bf16.msra.mxu0 0
        %917 = vmatprep.mubr.bf16.mxu0 0
        %918 = vmatmul.mubr.bf16.gmra.mrb[0].mxu0 %v880
        %v919 = vpop.f32.mrb[0].mxu0
        %v920 = vadd.f32 0.0, %v919
        %v921 = vpop.f32.mrb[0].mxu0
        %v922 = vpop.f32.mrb[0].mxu0
        %v923 = vpop.f32.mrb[0].mxu0
        %924 = vdwg.mxu0
        %926 = vrot.lane.b32.xlu0 %v920, 24
        %v927 = vpop.permute.xlu0 %926
        %vm929 = vcmask 261312
        %930 = vst.msk [vmem:[#allocation2] sm:$0xff] %vm929, %v927
        %v931 = vld [vmem:[#allocation2] sm:$0xff]
        %v932 = vpack.c.bf16 %v931, %v931
        %v933 = vld [vmem:[%s5] sm:$0xf]
        %v934 = vld [vmem:[%s5 + $0x4] sm:$0xf]
        %v935 = vld [vmem:[%s5 + $0x8] sm:$0xf]
        %v936 = vld [vmem:[%s5 + $0xc] sm:$0xf]
        %v937 = vld [vmem:[%s6] sm:$0x1]
        %v939 = vlaneseq
        %v940 = vshrl.u32 %v939, 7
        %v941 = vsub.s32 0, %v940
        %v942 = vrot.slane %v937, %v941
        %v948 = vunpack.c.l.b16 %v933
        %v949 = vunpack.c.l.b16 %v934
        %v950 = vunpack.c.l.b16 %v935
        %v951 = vunpack.c.l.b16 %v936
        %v952 = vpack.c.b16 %v949, %v948
        %v953 = vpack.c.b16 %v951, %v950
        %v957 = vsel %vm363, %v932, 0
        %959 = vmatprep.subr.bf16.mxu0 0
        %960 = vmatpush1.bf16.msra.mxu0 %v952
        %961 = vmatprep.subr.bf16.mxu0 0
        %962 = vmatpush1.bf16.msra.mxu0 %v953
        %963 = vmatprep.subr.bf16.mxu0 0
        %964 = vmatpush1.bf16.msra.mxu0 0
        %965 = vmatprep.subr.bf16.mxu0 0
        %966 = vmatpush1.bf16.msra.mxu0 0
        %967 = vmatprep.subr.bf16.mxu0 0
        %968 = vmatpush1.bf16.msra.mxu0 0
        %969 = vmatprep.subr.bf16.mxu0 0
        %970 = vmatpush1.bf16.msra.mxu0 0
        %971 = vmatprep.subr.bf16.mxu0 0
        %972 = vmatpush1.bf16.msra.mxu0 0
        %973 = vmatprep.subr.bf16.mxu0 0
        %974 = vmatpush1.bf16.msra.mxu0 0
        %975 = vmatprep.subr.bf16.mxu0 0
        %976 = vmatpush1.bf16.msra.mxu0 0
        %977 = vmatprep.subr.bf16.mxu0 0
        %978 = vmatpush1.bf16.msra.mxu0 0
        %979 = vmatprep.subr.bf16.mxu0 0
        %980 = vmatpush1.bf16.msra.mxu0 0
        %981 = vmatprep.subr.bf16.mxu0 0
        %982 = vmatpush1.bf16.msra.mxu0 0
        %983 = vmatprep.subr.bf16.mxu0 0
        %984 = vmatpush1.bf16.msra.mxu0 0
        %985 = vmatprep.subr.bf16.mxu0 0
        %986 = vmatpush1.bf16.msra.mxu0 0
        %987 = vmatprep.subr.bf16.mxu0 0
        %988 = vmatpush1.bf16.msra.mxu0 0
        %989 = vmatprep.subr.bf16.mxu0 0
        %990 = vmatpush1.bf16.msra.mxu0 0
        %991 = vmatprep.mubr.bf16.mxu0 0
        %992 = vmatmul.mubr.bf16.gmra.mrb[0].mxu0 %v957
        %v993 = vpop.f32.mrb[0].mxu0
        %v994 = vadd.f32 %v942, %v993
        %v995 = vpop.f32.mrb[0].mxu0
        %v996 = vpop.f32.mrb[0].mxu0
        %v997 = vpop.f32.mrb[0].mxu0
        %998 = vdwg.mxu0
        %999 = vst.msk [vmem:[%s336] sm:$0xff] %vm363, %v994
        %s1000 = sand.u32 %s199, 1
        %s1001 = scalar_lea.sflag [#allocation5], %s1000
        %s1002 = sand.u32 %s199, 1
        %s1003 = smul.addr %s1002, 8
        %s1004 = scalar_lea.vmem [#allocation9], %s1003
        // Predicated region
        $region61: #{tpu_custom_call.1} parent=47 // pred_check
          %p1005 = pneg %p209
        $region62: #{tpu_custom_call.1} parent=47 // pred_check_branch
          %1007 = sbr.rel (%p1005) target = $region64
        $region63: #{tpu_custom_call.1} parent=47 // pred_region
          %s1009 = ssub.s32 128, 128
          %1010 = vsyncadd %s1001, %s1009
          %s1011 = sadd.s32 %s30, %s29
          %s1012 = smul.addr %s1011, 128
          %s1013 = scalar_lea.hbm %s7, %s1012
          %s1015 = sshll.u32 %s1004, 4
          %s1016 = int_to_ptr.vmem [resolvable:$true] %s1015
          %1018 = dma.vmem_to_hbm [thread:$0]  %s1016, 128, %s1013, %s1001
        $region64: #{tpu_custom_call.1} parent=47 // pred_fallthru
          _
      $region48: #{tpu_custom_call.1} parent=5 // pred_fallthru
        _
      %p1019 = scmp.le.s32.totalorder 2, %s20
      // Predicated region
      $region65: #{tpu_custom_call.1} parent=5 // pred_check
        %p1020 = pneg %p1019
      $region66: #{tpu_custom_call.1} parent=5 // pred_check_branch
        %1022 = sbr.rel (%p1020) target = $region68
      $region67: #{tpu_custom_call.1} parent=5 // pred_region
        %s1023 = ssub.s32 %s20, 2
        // Predicated region
        $region69: #{tpu_custom_call.1} parent=67 // pred_check
          %p1024 = pneg %p215
        $region70: #{tpu_custom_call.1} parent=67 // pred_check_branch
          %1026 = sbr.rel (%p1024) target = $region72
        $region71: #{tpu_custom_call.1} parent=67 // pred_region
          %s1027 = sand.u32 %s200, 1
          %s1028 = scalar_lea.sflag [#allocation5], %s1027
          %s1029 = sand.u32 %s200, 1
          %s1030 = smul.addr %s1029, 8
          %s1031 = scalar_lea.vmem [#allocation9], %s1030
          %1032 = dma.done %s1028, 128
        $region72: #{tpu_custom_call.1} parent=67 // pred_fallthru
          _
      $region68: #{tpu_custom_call.1} parent=5 // pred_fallthru
        _
    $region6: #{tpu_custom_call.1} parent=1 // loop_footer
      %s24 = sadd.s32 1, %s20
    $region7: #{tpu_custom_call.1} parent=1 // loop_footer_branch
      %19 = sbr.rel target = $region3
    $region8: #{tpu_custom_call.1} parent=1 // loop_exit
      _
    %1033 = vsyncpa [#allocation4], 1
    %s1034 = scalar_lea.sflag [#allocation4], 1
    %1035 = vsyncpa %s1034, 1
    %1036 = vsyncpa [#allocation7], 1
    %1037 = vsyncpa [#allocation5], 1
    %s1038 = scalar_lea.sflag [#allocation5], 1
    %1039 = vsyncpa %s1038, 1

// kernel: tpu_custom_call.1
$region0: #{tpu_custom_call.1}
  #allocation0 [shape = 'u32[]', space=smem, size = 0x4, offset = 0x4, fixed_abs, tag = 'smem constant byte address 0x4 - core index']
  #allocation1 [shape = 'u32[144,128]{1,0:T(1,128)}', space=vmem, size = 0x12000, scoped, tag = 'internal scratch']
  #allocation2 [shape = 'f32[8,32]{1,0:T(8,128)}', space=vmem, size = 0x1000, scoped, tag = 'scratch operand']
  %s0 = inlined_call_operand.hbm [shape: f32[2,8,32], index: 0, kind: input, shape index: {}]
  %s1 = inlined_call_operand.hbm [shape: bf16[32,32], index: 1, kind: input, shape index: {}]
  %s2 = inlined_call_operand.vmem [shape: f32[1,32], index: 2, kind: input, shape index: {}]
  %s3 = inlined_call_operand.hbm [shape: bf16[32,64], index: 3, kind: input, shape index: {}]
  %s4 = inlined_call_operand.vmem [shape: f32[1,64], index: 4, kind: input, shape index: {}]
  %s5 = inlined_call_operand.vmem [shape: bf16[32,32], index: 5, kind: input, shape index: {}]
  %s6 = inlined_call_operand.vmem [shape: f32[1,32], index: 6, kind: input, shape index: {}]
  %s7 = inlined_call_operand.hbm [shape: f32[2,8,32], index: 7, kind: output, shape index: {}]
  %s8 = sld [smem:[#allocation0]]
  $region73: #{tpu_custom_call.1} parent=0
    _
  %s10 = ssub.s32 1, %s8
  %s11 = scalar_select 0, %s10, %s8
  $region1: #{tpu_custom_call.1} parent=0
    #allocation3 [shape = 'u8[8192]{0}', space=vmem, size = 0x2000, scoped, tag = 'input window, operand 0']
    #allocation4 [shape = 's32[2]{0}', space=sflag, size = 0x8, scoped, tag = 'scoped memory for tpu_custom_call.1']
    #allocation5 [shape = 's32[2]{0}', space=sflag, size = 0x8, scoped, tag = 'scoped memory for tpu_custom_call.1']
    #allocation6 [shape = 'u8[8192]{0}', space=vmem, size = 0x2000, scoped, tag = 'input window, operand 1, single buffered']
    #allocation7 [shape = 's32[1]{0}', space=sflag, size = 0x4, scoped, tag = 'scoped memory for tpu_custom_call.1']
    #allocation8 [shape = 'u8[8192]{0}', space=vmem, size = 0x2000, scoped, tag = 'input window, operand 3, single buffered']
    #allocation9 [shape = 'u8[8192]{0}', space=vmem, size = 0x2000, scoped, tag = 'output window, operand 0']
    %12 = vsyncpa [#allocation4], 0
    %s13 = scalar_lea.sflag [#allocation4], 1
    %14 = vsyncpa %s13, 0
    %15 = vsyncpa [#allocation7], 0
    %16 = vsyncpa [#allocation5], 0
    %s17 = scalar_lea.sflag [#allocation5], 1
    %18 = vsyncpa %s17, 0
    loop: start=0, step=1, limit=4
    $region2: #{tpu_custom_call.1} parent=1 // loop_pre_header
      _
    $region3: #{tpu_custom_call.1} parent=1 // loop_header
      %s20 = sphi 0, %s24
      %p21 = scmp.ge.s32.totalorder %s20, 4
      %s27 = sphi 0, %s39
      %s28 = sphi 0, %s35
      %s29 = sphi 0, %s27
      %s30 = sphi 0, %s28
      %s31 = sphi 0, %s29
      %s32 = sphi 0, %s30
      %s42 = sphi 0, %s44
      %s45 = sphi 0, %s42
      %s46 = sphi 0, %s45
      %s62 = sphi 0, %s46
      %s66 = sphi 0, %s66
      %s68 = sphi 0, %s66
      %s69 = sphi 0, %s68
      %s83 = sphi 0, %s69
      %s87 = sphi 0, %s87
      %s89 = sphi 0, %s87
      %s90 = sphi 0, %s89
      %s104 = sphi 0, %s90
      %s108 = sphi 0, %s108
      %s110 = sphi 0, %s108
      %s111 = sphi 0, %s110
      %s125 = sphi 0, %s111
      %s129 = sphi 0, %s129
      %s131 = sphi 0, %s129
      %s132 = sphi 0, %s131
      %s146 = sphi 0, %s132
      %s150 = sphi 0, %s150
      %s152 = sphi 0, %s150
      %s153 = sphi 0, %s152
      %s167 = sphi 0, %s153
      %s171 = sphi 0, %s171
      %s173 = sphi 0, %s171
      %s174 = sphi 0, %s173
      %s188 = sphi 0, %s174
      %s196 = sphi 0, %s198
      %s199 = sphi 0, %s196
      %s200 = sphi 0, %s199
      %s216 = sphi 0, %s200
    $region4: #{tpu_custom_call.1} parent=1 // loop_header_branch
      %23 = sbr.rel (%p21) target = $region8
    $region5: #{tpu_custom_call.1} parent=1 // loop_body
      %s25 = ssub.s32 %s20, 1
      %s26 = ssub.s32 %s20, 2
      %s33 = sadd.s32 1, %s28
      %p34 = scmp.ge.s32.totalorder %s33, 1
      %s35 = scalar_select %p34, 0, %s33
      %s36 = sadd.s32 1, %s27
      %s37 = scalar_select %p34, %s36, %s27
      %p38 = scmp.ge.s32.totalorder %s37, 2
      %s39 = scalar_select %p38, 0, %s37
      %s40 = ssub.s32 %s27, %s39
      %p41 = scmp.eq.s32.totalorder %s40, 0
      %s43 = sadd.s32 %s42, 1
      %s44 = scalar_select %p41, %s42, %s43
      %p47 = pneg %p41
      %p48 = scmp.eq.s32.totalorder %s20, 1
      %p49 = por %p47, %p48
      %p50 = scmp.ne.s32.totalorder %s42, %s45
      %p51 = scmp.eq.s32.totalorder %s20, 0
      %p52 = por %p50, %p51
      %p53 = scmp.ne.s32.totalorder %s42, %s45
      %p54 = scmp.eq.s32.totalorder %s25, 1
      %p55 = por %p53, %p54
      %p56 = scmp.ne.s32.totalorder %s45, %s46
      %p57 = scmp.eq.s32.totalorder %s25, 0
      %p58 = por %p56, %p57
      %p59 = scmp.ne.s32.totalorder %s45, %s46
      %p60 = scmp.eq.s32.totalorder %s26, 1
      %p61 = por %p59, %p60
      %p63 = scmp.ne.s32.totalorder %s46, %s62
      %p64 = scmp.eq.s32.totalorder %s26, 0
      %p65 = por %p63, %p64
      %s67 = sadd.s32 %s66, 1
      %p70 = scmp.eq.s32.totalorder %s20, 1
      %p71 = scmp.ne.s32.totalorder %s66, %s68
      %p72 = scmp.eq.s32.totalorder %s20, 0
      %p73 = por %p71, %p72
      %p74 = scmp.ne.s32.totalorder %s66, %s68
      %p75 = scmp.eq.s32.totalorder %s25, 1
      %p76 = por %p74, %p75
      %p77 = scmp.ne.s32.totalorder %s68, %s69
      %p78 = scmp.eq.s32.totalorder %s25, 0
      %p79 = por %p77, %p78
      %p80 = scmp.ne.s32.totalorder %s68, %s69
      %p81 = scmp.eq.s32.totalorder %s26, 1
      %p82 = por %p80, %p81
      %p84 = scmp.ne.s32.totalorder %s69, %s83
      %p85 = scmp.eq.s32.totalorder %s26, 0
      %p86 = por %p84, %p85
      %s88 = sadd.s32 %s87, 1
      %p91 = scmp.eq.s32.totalorder %s20, 1
      %p92 = scmp.ne.s32.totalorder %s87, %s89
      %p93 = scmp.eq.s32.totalorder %s20, 0
      %p94 = por %p92, %p93
      %p95 = scmp.ne.s32.totalorder %s87, %s89
      %p96 = scmp.eq.s32.totalorder %s25, 1
      %p97 = por %p95, %p96
      %p98 = scmp.ne.s32.totalorder %s89, %s90
      %p99 = scmp.eq.s32.totalorder %s25, 0
      %p100 = por %p98, %p99
      %p101 = scmp.ne.s32.totalorder %s89, %s90
      %p102 = scmp.eq.s32.totalorder %s26, 1
      %p103 = por %p101, %p102
      %p105 = scmp.ne.s32.totalorder %s90, %s104
      %p106 = scmp.eq.s32.totalorder %s26, 0
      %p107 = por %p105, %p106
      %s109 = sadd.s32 %s108, 1
      %p112 = scmp.eq.s32.totalorder %s20, 1
      %p113 = scmp.ne.s32.totalorder %s108, %s110
      %p114 = scmp.eq.s32.totalorder %s20, 0
      %p115 = por %p113, %p114
      %p116 = scmp.ne.s32.totalorder %s108, %s110
      %p117 = scmp.eq.s32.totalorder %s25, 1
      %p118 = por %p116, %p117
      %p119 = scmp.ne.s32.totalorder %s110, %s111
      %p120 = scmp.eq.s32.totalorder %s25, 0
      %p121 = por %p119, %p120
      %p122 = scmp.ne.s32.totalorder %s110, %s111
      %p123 = scmp.eq.s32.totalorder %s26, 1
      %p124 = por %p122, %p123
      %p126 = scmp.ne.s32.totalorder %s111, %s125
      %p127 = scmp.eq.s32.totalorder %s26, 0
      %p128 = por %p126, %p127
      %s130 = sadd.s32 %s129, 1
      %p133 = scmp.eq.s32.totalorder %s20, 1
      %p134 = scmp.ne.s32.totalorder %s129, %s131
      %p135 = scmp.eq.s32.totalorder %s20, 0
      %p136 = por %p134, %p135
      %p137 = scmp.ne.s32.totalorder %s129, %s131
      %p138 = scmp.eq.s32.totalorder %s25, 1
      %p139 = por %p137, %p138
      %p140 = scmp.ne.s32.totalorder %s131, %s132
      %p141 = scmp.eq.s32.totalorder %s25, 0
      %p142 = por %p140, %p141
      %p143 = scmp.ne.s32.totalorder %s131, %s132
      %p144 = scmp.eq.s32.totalorder %s26, 1
      %p145 = por %p143, %p144
      %p147 = scmp.ne.s32.totalorder %s132, %s146
      %p148 = scmp.eq.s32.totalorder %s26, 0
      %p149 = por %p147, %p148
      %s151 = sadd.s32 %s150, 1
      %p154 = scmp.eq.s32.totalorder %s20, 1
      %p155 = scmp.ne.s32.totalorder %s150, %s152
      %p156 = scmp.eq.s32.totalorder %s20, 0
      %p157 = por %p155, %p156
      %p158 = scmp.ne.s32.totalorder %s150, %s152
      %p159 = scmp.eq.s32.totalorder %s25, 1
      %p160 = por %p158, %p159
      %p161 = scmp.ne.s32.totalorder %s152, %s153
      %p162 = scmp.eq.s32.totalorder %s25, 0
      %p163 = por %p161, %p162
      %p164 = scmp.ne.s32.totalorder %s152, %s153
      %p165 = scmp.eq.s32.totalorder %s26, 1
      %p166 = por %p164, %p165
      %p168 = scmp.ne.s32.totalorder %s153, %s167
      %p169 = scmp.eq.s32.totalorder %s26, 0
      %p170 = por %p168, %p169
      %s172 = sadd.s32 %s171, 1
      %p175 = scmp.eq.s32.totalorder %s20, 1
      %p176 = scmp.ne.s32.totalorder %s171, %s173
      %p177 = scmp.eq.s32.totalorder %s20, 0
      %p178 = por %p176, %p177
      %p179 = scmp.ne.s32.totalorder %s171, %s173
      %p180 = scmp.eq.s32.totalorder %s25, 1
      %p181 = por %p179, %p180
      %p182 = scmp.ne.s32.totalorder %s173, %s174
      %p183 = scmp.eq.s32.totalorder %s25, 0
      %p184 = por %p182, %p183
      %p185 = scmp.ne.s32.totalorder %s173, %s174
      %p186 = scmp.eq.s32.totalorder %s26, 1
      %p187 = por %p185, %p186
      %p189 = scmp.ne.s32.totalorder %s174, %s188
      %p190 = scmp.eq.s32.totalorder %s26, 0
      %p191 = por %p189, %p190
      %s192 = ssub.s32 %s27, %s39
      %s193 = ssub.s32 %s28, %s35
      %s194 = sor.u32 %s192, %s193
      %p195 = scmp.eq.s32.totalorder %s194, 0
      %s197 = sadd.s32 %s196, 1
      %s198 = scalar_select %p195, %s196, %s197
      %p201 = pneg %p195
      %p202 = scmp.eq.s32.totalorder %s20, 1
      %p203 = por %p201, %p202
      %p204 = scmp.ne.s32.totalorder %s196, %s199
      %p205 = scmp.eq.s32.totalorder %s20, 0
      %p206 = por %p204, %p205
      %p207 = scmp.ne.s32.totalorder %s196, %s199
      %p208 = scmp.eq.s32.totalorder %s25, 1
      %p209 = por %p207, %p208
      %p210 = scmp.ne.s32.totalorder %s199, %s200
      %p211 = scmp.eq.s32.totalorder %s25, 0
      %p212 = por %p210, %p211
      %p213 = scmp.ne.s32.totalorder %s199, %s200
      %p214 = scmp.eq.s32.totalorder %s26, 1
      %p215 = por %p213, %p214
      %p217 = scmp.ne.s32.totalorder %s200, %s216
      %p218 = scmp.eq.s32.totalorder %s26, 0
      %p219 = por %p217, %p218
      %p220 = scmp.le.s32.totalorder 1, %s20
      %p221 = scmp.lt.s32.totalorder %s20, 3
      %p222 = pnand %p220, %p221
      %p223 = pneg %p222
      // Predicated region
      $region9: #{tpu_custom_call.1} parent=5 // pred_check
        _
      $region10: #{tpu_custom_call.1} parent=5 // pred_check_branch
        %225 = sbr.rel (%p222) target = $region12
      $region11: #{tpu_custom_call.1} parent=5 // pred_region
        %s226 = ssub.s32 %s20, 1
        // Predicated region
        $region13: #{tpu_custom_call.1} parent=11 // pred_check
          %p227 = pneg %p79
        $region14: #{tpu_custom_call.1} parent=11 // pred_check_branch
          %229 = sbr.rel (%p227) target = $region16
        $region15: #{tpu_custom_call.1} parent=11 // pred_region
          %s231 = ssub.s32 256, 256
          %232 = vsyncadd [#allocation7], %s231
          %s233 = sshll.u32 [#allocation6], 4
          %s234 = int_to_ptr.vmem [resolvable:$true] %s233
          %239 = dma.hbm_to_vmem [thread:$0]  %s1, 256, %s234, [#allocation7], 64, 64, 4
        $region16: #{tpu_custom_call.1} parent=11 // pred_fallthru
          _
        // Predicated region
        $region17: #{tpu_custom_call.1} parent=11 // pred_check
          %p240 = pneg %p100
        $region18: #{tpu_custom_call.1} parent=11 // pred_check_branch
          %242 = sbr.rel (%p240) target = $region20
        $region19: #{tpu_custom_call.1} parent=11 // pred_region
          _
        $region20: #{tpu_custom_call.1} parent=11 // pred_fallthru
          _
        // Predicated region
        $region21: #{tpu_custom_call.1} parent=11 // pred_check
          %p243 = pneg %p121
        $region22: #{tpu_custom_call.1} parent=11 // pred_check_branch
          %245 = sbr.rel (%p243) target = $region24
        $region23: #{tpu_custom_call.1} parent=11 // pred_region
          %s247 = ssub.s32 256, 256
          %248 = vsyncadd [#allocation7], %s247
          %s249 = sshll.u32 [#allocation8], 4
          %s250 = int_to_ptr.vmem [resolvable:$true] %s249
          %255 = dma.hbm_to_vmem [thread:$0]  %s3, 256, %s250, [#allocation7], 64, 64, 4
        $region24: #{tpu_custom_call.1} parent=11 // pred_fallthru
          _
        // Predicated region
        $region25: #{tpu_custom_call.1} parent=11 // pred_check
          %p256 = pneg %p142
        $region26: #{tpu_custom_call.1} parent=11 // pred_check_branch
          %258 = sbr.rel (%p256) target = $region28
        $region27: #{tpu_custom_call.1} parent=11 // pred_region
          _
        $region28: #{tpu_custom_call.1} parent=11 // pred_fallthru
          _
        // Predicated region
        $region29: #{tpu_custom_call.1} parent=11 // pred_check
          %p259 = pneg %p163
        $region30: #{tpu_custom_call.1} parent=11 // pred_check_branch
          %261 = sbr.rel (%p259) target = $region32
        $region31: #{tpu_custom_call.1} parent=11 // pred_region
          _
        $region32: #{tpu_custom_call.1} parent=11 // pred_fallthru
          _
        // Predicated region
        $region33: #{tpu_custom_call.1} parent=11 // pred_check
          %p262 = pneg %p184
        $region34: #{tpu_custom_call.1} parent=11 // pred_check_branch
          %264 = sbr.rel (%p262) target = $region36
        $region35: #{tpu_custom_call.1} parent=11 // pred_region
          _
        $region36: #{tpu_custom_call.1} parent=11 // pred_fallthru
          _
      $region12: #{tpu_custom_call.1} parent=5 // pred_fallthru
        _
      %p265 = scmp.lt.s32.totalorder %s20, 2
      // Predicated region
      $region37: #{tpu_custom_call.1} parent=5 // pred_check
        %p266 = pneg %p265
      $region38: #{tpu_custom_call.1} parent=5 // pred_check_branch
        %268 = sbr.rel (%p266) target = $region40
      $region39: #{tpu_custom_call.1} parent=5 // pred_region
        // Predicated region
        $region41: #{tpu_custom_call.1} parent=39 // pred_check
          %p269 = pneg %p52
        $region42: #{tpu_custom_call.1} parent=39 // pred_check_branch
          %271 = sbr.rel (%p269) target = $region44
        $region43: #{tpu_custom_call.1} parent=39 // pred_region
          %s272 = sand.u32 %s42, 1
          %s273 = scalar_lea.sflag [#allocation4], %s272
          %s274 = sand.u32 %s42, 1
          %s275 = smul.addr %s274, 8
          %s276 = scalar_lea.vmem [#allocation3], %s275
          %s278 = ssub.s32 128, 128
          %279 = vsyncadd %s273, %s278
          %s280 = smul.addr %s27, 128
          %s281 = scalar_lea.hbm %s0, %s280
          %s283 = sshll.u32 %s276, 4
          %s284 = int_to_ptr.vmem [resolvable:$true] %s283
          %286 = dma.hbm_to_vmem [thread:$0]  %s281, 128, %s284, %s273
        $region44: #{tpu_custom_call.1} parent=39 // pred_fallthru
          _
      $region40: #{tpu_custom_call.1} parent=5 // pred_fallthru
        _
      %p287 = scmp.le.s32.totalorder 1, %s20
      %p288 = scmp.lt.s32.totalorder %s20, 3
      %p289 = pnand %p287, %p288
      %p290 = pneg %p289
      // Predicated region
      $region45: #{tpu_custom_call.1} parent=5 // pred_check
        _
      $region46: #{tpu_custom_call.1} parent=5 // pred_check_branch
        %292 = sbr.rel (%p289) target = $region48
      $region47: #{tpu_custom_call.1} parent=5 // pred_region
        %s293 = ssub.s32 %s20, 1
        %s294 = sand.u32 %s45, 1
        %s295 = scalar_lea.sflag [#allocation4], %s294
        %s296 = sand.u32 %s45, 1
        %s297 = smul.addr %s296, 8
        %s298 = scalar_lea.vmem [#allocation3], %s297
        // Predicated region
        $region49: #{tpu_custom_call.1} parent=47 // pred_check
          %p299 = pneg %p58
        $region50: #{tpu_custom_call.1} parent=47 // pred_check_branch
          %301 = sbr.rel (%p299) target = $region52
        $region51: #{tpu_custom_call.1} parent=47 // pred_region
          %302 = dma.done %s295, 128
        $region52: #{tpu_custom_call.1} parent=47 // pred_fallthru
          _
        // Predicated region
        $region53: #{tpu_custom_call.1} parent=47 // pred_check
          %p303 = pneg %p79
        $region54: #{tpu_custom_call.1} parent=47 // pred_check_branch
          %305 = sbr.rel (%p303) target = $region56
        $region55: #{tpu_custom_call.1} parent=47 // pred_region
          %306 = dma.done [#allocation7], 256
        $region56: #{tpu_custom_call.1} parent=47 // pred_fallthru
          _
        // Predicated region
        $region57: #{tpu_custom_call.1} parent=47 // pred_check
          %p307 = pneg %p121
        $region58: #{tpu_custom_call.1} parent=47 // pred_check_branch
          %309 = sbr.rel (%p307) target = $region60
        $region59: #{tpu_custom_call.1} parent=47 // pred_region
          %310 = dma.done [#allocation7], 256
        $region60: #{tpu_custom_call.1} parent=47 // pred_fallthru
          _
        %s311 = sand.u32 %s45, 1
        %s312 = scalar_lea.sflag [#allocation4], %s311
        %s313 = sand.u32 %s45, 1
        %s314 = smul.addr %s313, 8
        %s315 = scalar_lea.vmem [#allocation3], %s314
        %p316 = pneg %p58
        %p317 = pneg %p55
        %p318 = pneg %p79
        %p319 = pneg %p76
        %p320 = pneg %p100
        %p321 = pneg %p97
        %p322 = pneg %p121
        %p323 = pneg %p118
        %p324 = pneg %p142
        %p325 = pneg %p139
        %p326 = pneg %p163
        %p327 = pneg %p160
        %p328 = pneg %p184
        %p329 = pneg %p181
        %p330 = pneg %p212
        %p331 = pneg %p209
        %s332 = sand.u32 %s199, 1
        %s333 = scalar_lea.sflag [#allocation5], %s332
        %s334 = sand.u32 %s199, 1
        %s335 = smul.addr %s334, 8
        %s336 = scalar_lea.vmem [#allocation9], %s335
        %v338 = vld [vmem:[%s298] sm:$0xff]
        %v339 = vpack.c.bf16 %v338, %v338
        %v340 = vld [vmem:[#allocation6] sm:$0xf]
        %v341 = vld [vmem:[#allocation6 + $0x4] sm:$0xf]
        %v342 = vld [vmem:[#allocation6 + $0x8] sm:$0xf]
        %v343 = vld [vmem:[#allocation6 + $0xc] sm:$0xf]
        %v344 = vld [vmem:[%s2] sm:$0x1]
        %v346 = vlaneseq
        %v347 = vshrl.u32 %v346, 7
        %v348 = vsub.s32 0, %v347
        %v349 = vrot.slane %v344, %v348
        %v355 = vunpack.c.l.b16 %v340
        %v356 = vunpack.c.l.b16 %v341
        %v357 = vunpack.c.l.b16 %v342
        %v358 = vunpack.c.l.b16 %v343
        %v359 = vpack.c.b16 %v356, %v355
        %v360 = vpack.c.b16 %v358, %v357
        %vm363 = vcmask 261120
        %v365 = vsel %vm363, %v339, 0
        %367 = vmatprep.subr.bf16.mxu0 0
        %368 = vmatpush1.bf16.msra.mxu0 %v359
        %369 = vmatprep.subr.bf16.mxu0 0
        %370 = vmatpush1.bf16.msra.mxu0 %v360
        %371 = vmatprep.subr.bf16.mxu0 0
        %372 = vmatpush1.bf16.msra.mxu0 0
        %373 = vmatprep.subr.bf16.mxu0 0
        %374 = vmatpush1.bf16.msra.mxu0 0
        %375 = vmatprep.subr.bf16.mxu0 0
        %376 = vmatpush1.bf16.msra.mxu0 0
        %377 = vmatprep.subr.bf16.mxu0 0
        %378 = vmatpush1.bf16.msra.mxu0 0
        %379 = vmatprep.subr.bf16.mxu0 0
        %380 = vmatpush1.bf16.msra.mxu0 0
        %381 = vmatprep.subr.bf16.mxu0 0
        %382 = vmatpush1.bf16.msra.mxu0 0
        %383 = vmatprep.subr.bf16.mxu0 0
        %384 = vmatpush1.bf16.msra.mxu0 0
        %385 = vmatprep.subr.bf16.mxu0 0
        %386 = vmatpush1.bf16.msra.mxu0 0
        %387 = vmatprep.subr.bf16.mxu0 0
        %388 = vmatpush1.bf16.msra.mxu0 0
        %389 = vmatprep.subr.bf16.mxu0 0
        %390 = vmatpush1.bf16.msra.mxu0 0
        %391 = vmatprep.subr.bf16.mxu0 0
        %392 = vmatpush1.bf16.msra.mxu0 0
        %393 = vmatprep.subr.bf16.mxu0 0
        %394 = vmatpush1.bf16.msra.mxu0 0
        %395 = vmatprep.subr.bf16.mxu0 0
        %396 = vmatpush1.bf16.msra.mxu0 0
        %397 = vmatprep.subr.bf16.mxu0 0
        %398 = vmatpush1.bf16.msra.mxu0 0
        %399 = vmatprep.mubr.bf16.mxu0 0
        %400 = vmatmul.mubr.bf16.gmra.mrb[0].mxu0 %v365
        %v401 = vpop.f32.mrb[0].mxu0
        %v402 = vadd.f32 %v349, %v401
        %v403 = vpop.f32.mrb[0].mxu0
        %v404 = vpop.f32.mrb[0].mxu0
        %v405 = vpop.f32.mrb[0].mxu0
        %406 = vdwg.mxu0
        %v407 = vld [vmem:[#allocation8] sm:$0xf]
        %v408 = vld [vmem:[#allocation8 + $0x4] sm:$0xf]
        %v409 = vld [vmem:[#allocation8 + $0x8] sm:$0xf]
        %v410 = vld [vmem:[#allocation8 + $0xc] sm:$0xf]
        %v411 = vld [vmem:[%s4] sm:$0x1]
        %v413 = vlaneseq
        %v414 = vshrl.u32 %v413, 7
        %v415 = vsub.s32 0, %v414
        %v416 = vrot.slane %v411, %v415
        %v422 = vunpack.c.l.b16 %v407
        %v423 = vunpack.c.l.b16 %v408
        %v424 = vunpack.c.l.b16 %v409
        %v425 = vunpack.c.l.b16 %v410
        %v426 = vpack.c.b16 %v423, %v422
        %v427 = vpack.c.b16 %v425, %v424
        %430 = vmatprep.subr.bf16.mxu0 0
        %431 = vmatpush1.bf16.msra.mxu0 %v426
        %432 = vmatprep.subr.bf16.mxu0 0
        %433 = vmatpush1.bf16.msra.mxu0 %v427
        %434 = vmatprep.subr.bf16.mxu0 0
        %435 = vmatpush1.bf16.msra.mxu0 0
        %436 = vmatprep.subr.bf16.mxu0 0
        %437 = vmatpush1.bf16.msra.mxu0 0
        %438 = vmatprep.subr.bf16.mxu0 0
        %439 = vmatpush1.bf16.msra.mxu0 0
        %440 = vmatprep.subr.bf16.mxu0 0
        %441 = vmatpush1.bf16.msra.mxu0 0
        %442 = vmatprep.subr.bf16.mxu0 0
        %443 = vmatpush1.bf16.msra.mxu0 0
        %444 = vmatprep.subr.bf16.mxu0 0
        %445 = vmatpush1.bf16.msra.mxu0 0
        %446 = vmatprep.subr.bf16.mxu0 0
        %447 = vmatpush1.bf16.msra.mxu0 0
        %448 = vmatprep.subr.bf16.mxu0 0
        %449 = vmatpush1.bf16.msra.mxu0 0
        %450 = vmatprep.subr.bf16.mxu0 0
        %451 = vmatpush1.bf16.msra.mxu0 0
        %452 = vmatprep.subr.bf16.mxu0 0
        %453 = vmatpush1.bf16.msra.mxu0 0
        %454 = vmatprep.subr.bf16.mxu0 0
        %455 = vmatpush1.bf16.msra.mxu0 0
        %456 = vmatprep.subr.bf16.mxu0 0
        %457 = vmatpush1.bf16.msra.mxu0 0
        %458 = vmatprep.subr.bf16.mxu0 0
        %459 = vmatpush1.bf16.msra.mxu0 0
        %460 = vmatprep.subr.bf16.mxu0 0
        %461 = vmatpush1.bf16.msra.mxu0 0
        %462 = vmatprep.mubr.bf16.mxu0 0
        %463 = vmatmul.mubr.bf16.gmra.mrb[0].mxu0 %v365
        %v464 = vpop.f32.mrb[0].mxu0
        %v465 = vadd.f32 %v416, %v464
        %v466 = vpop.f32.mrb[0].mxu0
        %v467 = vpop.f32.mrb[0].mxu0
        %v468 = vpop.f32.mrb[0].mxu0
        %469 = vdwg.mxu0
        %v470 = vpack.c.bf16 %v402, %v402
        %v471 = vpack.c.bf16 %v465, %v465
        %vm472 = vcmask 64512
        %v474 = vsel %vm472, %v470, 0
        %v477 = vsel %vm472, %v471, 0
        %479 = vmatprep.subr.bf16.mxu0 0
        %480 = vmatpush1.bf16.xpose.msra.mxu0 %v477
        %481 = vmatprep.subr.bf16.mxu0 0
        %482 = vmatpush1.bf16.xpose.msra.mxu0 0
        %483 = vmatprep.subr.bf16.mxu0 0
        %484 = vmatpush1.bf16.xpose.msra.mxu0 0
        %485 = vmatprep.subr.bf16.mxu0 0
        %486 = vmatpush1.bf16.xpose.msra.mxu0 0
        %487 = vmatprep.subr.bf16.mxu0 0
        %488 = vmatpush1.bf16.xpose.msra.mxu0 0
        %489 = vmatprep.subr.bf16.mxu0 0
        %490 = vmatpush1.bf16.xpose.msra.mxu0 0
        %491 = vmatprep.subr.bf16.mxu0 0
        %492 = vmatpush1.bf16.xpose.msra.mxu0 0
        %493 = vmatprep.subr.bf16.mxu0 0
        %494 = vmatpush1.bf16.xpose.msra.mxu0 0
        %495 = vmatprep.subr.bf16.mxu0 0
        %496 = vmatpush1.bf16.xpose.msra.mxu0 0
        %497 = vmatprep.subr.bf16.mxu0 0
        %498 = vmatpush1.bf16.xpose.msra.mxu0 0
        %499 = vmatprep.subr.bf16.mxu0 0
        %500 = vmatpush1.bf16.xpose.msra.mxu0 0
        %501 = vmatprep.subr.bf16.mxu0 0
        %502 = vmatpush1.bf16.xpose.msra.mxu0 0
        %503 = vmatprep.subr.bf16.mxu0 0
        %504 = vmatpush1.bf16.xpose.msra.mxu0 0
        %505 = vmatprep.subr.bf16.mxu0 0
        %506 = vmatpush1.bf16.xpose.msra.mxu0 0
        %507 = vmatprep.subr.bf16.mxu0 0
        %508 = vmatpush1.bf16.xpose.msra.mxu0 0
        %509 = vmatprep.subr.bf16.mxu0 0
        %510 = vmatpush1.bf16.xpose.msra.mxu0 0
        %511 = vmatprep.mubr.bf16.mxu0 0
        %512 = vmatmul.mubr.bf16.gmra.mrb[0].mxu0 %v474
        %v513 = vpop.f32.mrb[0].mxu0
        %v514 = vadd.f32 0.0, %v513
        %v515 = vpop.f32.mrb[0].mxu0
        %v516 = vpop.f32.mrb[0].mxu0
        %v517 = vpop.f32.mrb[0].mxu0
        %518 = vdwg.mxu0
        %v519 = vsel %vm472, %v514, -inf
        %520 = vmax.xlane.f32.xlu0 %v519
        %v521 = vpop.xlane.xlu0 %520
        %v522 = vsub.f32 %v514, %v521
        %v523 = vmul.f32 %v522, 1.442695
        %v524 = vpow.pop %v523
        %v525 = vsel %vm472, %v524, 0.0
        %526 = vadd.xlane.f32.xlu0 %v525
        %v527 = vpop.xlane.xlu0 %526
        %v528 = vrcp.pop %v527
        %v529 = vmul.f32 %v524, %v528
        %v530 = vpack.c.bf16 %v529, %v529
        %532 = vrot.lane.b32.xlu0 %v471, 96
        %v533 = vpop.permute.xlu0 %532
        %v535 = vsel %vm472, %v530, 0
        %vm537 = vcmask 1043456
        %v539 = vsel %vm537, %v533, 0
        %541 = vmatprep.subr.bf16.mxu0 0
        %542 = vmatpush1.bf16.msra.mxu0 %v539
        %543 = vmatprep.subr.bf16.mxu0 0
        %544 = vmatpush1.bf16.msra.mxu0 0
        %545 = vmatprep.subr.bf16.mxu0 0
        %546 = vmatpush1.bf16.msra.mxu0 0
        %547 = vmatprep.subr.bf16.mxu0 0
        %548 = vmatpush1.bf16.msra.mxu0 0
        %549 = vmatprep.subr.bf16.mxu0 0
        %550 = vmatpush1.bf16.msra.mxu0 0
        %551 = vmatprep.subr.bf16.mxu0 0
        %552 = vmatpush1.bf16.msra.mxu0 0
        %553 = vmatprep.subr.bf16.mxu0 0
        %554 = vmatpush1.bf16.msra.mxu0 0
        %555 = vmatprep.subr.bf16.mxu0 0
        %556 = vmatpush1.bf16.msra.mxu0 0
        %557 = vmatprep.subr.bf16.mxu0 0
        %558 = vmatpush1.bf16.msra.mxu0 0
        %559 = vmatprep.subr.bf16.mxu0 0
        %560 = vmatpush1.bf16.msra.mxu0 0
        %561 = vmatprep.subr.bf16.mxu0 0
        %562 = vmatpush1.bf16.msra.mxu0 0
        %563 = vmatprep.subr.bf16.mxu0 0
        %564 = vmatpush1.bf16.msra.mxu0 0
        %565 = vmatprep.subr.bf16.mxu0 0
        %566 = vmatpush1.bf16.msra.mxu0 0
        %567 = vmatprep.subr.bf16.mxu0 0
        %568 = vmatpush1.bf16.msra.mxu0 0
        %569 = vmatprep.subr.bf16.mxu0 0
        %570 = vmatpush1.bf16.msra.mxu0 0
        %571 = vmatprep.subr.bf16.mxu0 0
        %572 = vmatpush1.bf16.msra.mxu0 0
        %573 = vmatprep.mubr.bf16.mxu0 0
        %574 = vmatmul.mubr.bf16.gmra.mrb[0].mxu0 %v535
        %v575 = vpop.f32.mrb[0].mxu0
        %v576 = vadd.f32 0.0, %v575
        %v577 = vpop.f32.mrb[0].mxu0
        %v578 = vpop.f32.mrb[0].mxu0
        %v579 = vpop.f32.mrb[0].mxu0
        %580 = vdwg.mxu0
        %581 = vst.msk [vmem:[#allocation2] sm:$0xff] %vm472, %v576
        %583 = vrot.lane.b32.xlu0 %v470, 120
        %v584 = vpop.permute.xlu0 %583
        %585 = vrot.lane.b32.xlu0 %v471, 120
        %v586 = vpop.permute.xlu0 %585
        %v588 = vsel %vm472, %v584, 0
        %v591 = vsel %vm472, %v586, 0
        %593 = vmatprep.subr.bf16.mxu0 0
        %594 = vmatpush1.bf16.xpose.msra.mxu0 %v591
        %595 = vmatprep.subr.bf16.mxu0 0
        %596 = vmatpush1.bf16.xpose.msra.mxu0 0
        %597 = vmatprep.subr.bf16.mxu0 0
        %598 = vmatpush1.bf16.xpose.msra.mxu0 0
        %599 = vmatprep.subr.bf16.mxu0 0
        %600 = vmatpush1.bf16.xpose.msra.mxu0 0
        %601 = vmatprep.subr.bf16.mxu0 0
        %602 = vmatpush1.bf16.xpose.msra.mxu0 0
        %603 = vmatprep.subr.bf16.mxu0 0
        %604 = vmatpush1.bf16.xpose.msra.mxu0 0
        %605 = vmatprep.subr.bf16.mxu0 0
        %606 = vmatpush1.bf16.xpose.msra.mxu0 0
        %607 = vmatprep.subr.bf16.mxu0 0
        %608 = vmatpush1.bf16.xpose.msra.mxu0 0
        %609 = vmatprep.subr.bf16.mxu0 0
        %610 = vmatpush1.bf16.xpose.msra.mxu0 0
        %611 = vmatprep.subr.bf16.mxu0 0
        %612 = vmatpush1.bf16.xpose.msra.mxu0 0
        %613 = vmatprep.subr.bf16.mxu0 0
        %614 = vmatpush1.bf16.xpose.msra.mxu0 0
        %615 = vmatprep.subr.bf16.mxu0 0
        %616 = vmatpush1.bf16.xpose.msra.mxu0 0
        %617 = vmatprep.subr.bf16.mxu0 0
        %618 = vmatpush1.bf16.xpose.msra.mxu0 0
        %619 = vmatprep.subr.bf16.mxu0 0
        %620 = vmatpush1.bf16.xpose.msra.mxu0 0
        %621 = vmatprep.subr.bf16.mxu0 0
        %622 = vmatpush1.bf16.xpose.msra.mxu0 0
        %623 = vmatprep.subr.bf16.mxu0 0
        %624 = vmatpush1.bf16.xpose.msra.mxu0 0
        %625 = vmatprep.mubr.bf16.mxu0 0
        %626 = vmatmul.mubr.bf16.gmra.mrb[0].mxu0 %v588
        %v627 = vpop.f32.mrb[0].mxu0
        %v628 = vadd.f32 0.0, %v627
        %v629 = vpop.f32.mrb[0].mxu0
        %v630 = vpop.f32.mrb[0].mxu0
        %v631 = vpop.f32.mrb[0].mxu0
        %632 = vdwg.mxu0
        %v633 = vsel %vm472, %v628, -inf
        %634 = vmax.xlane.f32.xlu0 %v633
        %v635 = vpop.xlane.xlu0 %634
        %v636 = vsub.f32 %v628, %v635
        %v637 = vmul.f32 %v636, 1.442695
        %v638 = vpow.pop %v637
        %v639 = vsel %vm472, %v638, 0.0
        %640 = vadd.xlane.f32.xlu0 %v639
        %v641 = vpop.xlane.xlu0 %640
        %v642 = vrcp.pop %v641
        %v643 = vmul.f32 %v638, %v642
        %v644 = vpack.c.bf16 %v643, %v643
        %645 = vrot.lane.b32.xlu0 %v471, 88
        %v646 = vpop.permute.xlu0 %645
        %v648 = vsel %vm472, %v644, 0
        %v651 = vsel %vm537, %v646, 0
        %653 = vmatprep.subr.bf16.mxu0 0
        %654 = vmatpush1.bf16.msra.mxu0 %v651
        %655 = vmatprep.subr.bf16.mxu0 0
        %656 = vmatpush1.bf16.msra.mxu0 0
        %657 = vmatprep.subr.bf16.mxu0 0
        %658 = vmatpush1.bf16.msra.mxu0 0
        %659 = vmatprep.subr.bf16.mxu0 0
        %660 = vmatpush1.bf16.msra.mxu0 0
        %661 = vmatprep.subr.bf16.mxu0 0
        %662 = vmatpush1.bf16.msra.mxu0 0
        %663 = vmatprep.subr.bf16.mxu0 0
        %664 = vmatpush1.bf16.msra.mxu0 0
        %665 = vmatprep.subr.bf16.mxu0 0
        %666 = vmatpush1.bf16.msra.mxu0 0
        %667 = vmatprep.subr.bf16.mxu0 0
        %668 = vmatpush1.bf16.msra.mxu0 0
        %669 = vmatprep.subr.bf16.mxu0 0
        %670 = vmatpush1.bf16.msra.mxu0 0
        %671 = vmatprep.subr.bf16.mxu0 0
        %672 = vmatpush1.bf16.msra.mxu0 0
        %673 = vmatprep.subr.bf16.mxu0 0
        %674 = vmatpush1.bf16.msra.mxu0 0
        %675 = vmatprep.subr.bf16.mxu0 0
        %676 = vmatpush1.bf16.msra.mxu0 0
        %677 = vmatprep.subr.bf16.mxu0 0
        %678 = vmatpush1.bf16.msra.mxu0 0
        %679 = vmatprep.subr.bf16.mxu0 0
        %680 = vmatpush1.bf16.msra.mxu0 0
        %681 = vmatprep.subr.bf16.mxu0 0
        %682 = vmatpush1.bf16.msra.mxu0 0
        %683 = vmatprep.subr.bf16.mxu0 0
        %684 = vmatpush1.bf16.msra.mxu0 0
        %685 = vmatprep.mubr.bf16.mxu0 0
        %686 = vmatmul.mubr.bf16.gmra.mrb[0].mxu0 %v648
        %v687 = vpop.f32.mrb[0].mxu0
        %v688 = vadd.f32 0.0, %v687
        %v689 = vpop.f32.mrb[0].mxu0
        %v690 = vpop.f32.mrb[0].mxu0
        %v691 = vpop.f32.mrb[0].mxu0
        %692 = vdwg.mxu0
        %694 = vrot.lane.b32.xlu0 %v688, 8
        %v695 = vpop.permute.xlu0 %694
        %vm697 = vcmask 130112
        %698 = vst.msk [vmem:[#allocation2] sm:$0xff] %vm697, %v695
        %699 = vrot.lane.b32.xlu0 %v470, 112
        %v700 = vpop.permute.xlu0 %699
        %701 = vrot.lane.b32.xlu0 %v471, 112
        %v702 = vpop.permute.xlu0 %701
        %v704 = vsel %vm472, %v700, 0
        %v707 = vsel %vm472, %v702, 0
        %709 = vmatprep.subr.bf16.mxu0 0
        %710 = vmatpush1.bf16.xpose.msra.mxu0 %v707
        %711 = vmatprep.subr.bf16.mxu0 0
        %712 = vmatpush1.bf16.xpose.msra.mxu0 0
        %713 = vmatprep.subr.bf16.mxu0 0
        %714 = vmatpush1.bf16.xpose.msra.mxu0 0
        %715 = vmatprep.subr.bf16.mxu0 0
        %716 = vmatpush1.bf16.xpose.msra.mxu0 0
        %717 = vmatprep.subr.bf16.mxu0 0
        %718 = vmatpush1.bf16.xpose.msra.mxu0 0
        %719 = vmatprep.subr.bf16.mxu0 0
        %720 = vmatpush1.bf16.xpose.msra.mxu0 0
        %721 = vmatprep.subr.bf16.mxu0 0
        %722 = vmatpush1.bf16.xpose.msra.mxu0 0
        %723 = vmatprep.subr.bf16.mxu0 0
        %724 = vmatpush1.bf16.xpose.msra.mxu0 0
        %725 = vmatprep.subr.bf16.mxu0 0
        %726 = vmatpush1.bf16.xpose.msra.mxu0 0
        %727 = vmatprep.subr.bf16.mxu0 0
        %728 = vmatpush1.bf16.xpose.msra.mxu0 0
        %729 = vmatprep.subr.bf16.mxu0 0
        %730 = vmatpush1.bf16.xpose.msra.mxu0 0
        %731 = vmatprep.subr.bf16.mxu0 0
        %732 = vmatpush1.bf16.xpose.msra.mxu0 0
        %733 = vmatprep.subr.bf16.mxu0 0
        %734 = vmatpush1.bf16.xpose.msra.mxu0 0
        %735 = vmatprep.subr.bf16.mxu0 0
        %736 = vmatpush1.bf16.xpose.msra.mxu0 0
        %737 = vmatprep.subr.bf16.mxu0 0
        %738 = vmatpush1.bf16.xpose.msra.mxu0 0
        %739 = vmatprep.subr.bf16.mxu0 0
        %740 = vmatpush1.bf16.xpose.msra.mxu0 0
        %741 = vmatprep.mubr.bf16.mxu0 0
        %742 = vmatmul.mubr.bf16.gmra.mrb[0].mxu0 %v704
        %v743 = vpop.f32.mrb[0].mxu0
        %v744 = vadd.f32 0.0, %v743
        %v745 = vpop.f32.mrb[0].mxu0
        %v746 = vpop.f32.mrb[0].mxu0
        %v747 = vpop.f32.mrb[0].mxu0
        %748 = vdwg.mxu0
        %v749 = vsel %vm472, %v744, -inf
        %750 = vmax.xlane.f32.xlu0 %v749
        %v751 = vpop.xlane.xlu0 %750
        %v752 = vsub.f32 %v744, %v751
        %v753 = vmul.f32 %v752, 1.442695
        %v754 = vpow.pop %v753
        %v755 = vsel %vm472, %v754, 0.0
        %756 = vadd.xlane.f32.xlu0 %v755
        %v757 = vpop.xlane.xlu0 %756
        %v758 = vrcp.pop %v757
        %v759 = vmul.f32 %v754, %v758
        %v760 = vpack.c.bf16 %v759, %v759
        %761 = vrot.lane.b32.xlu0 %v471, 80
        %v762 = vpop.permute.xlu0 %761
        %v764 = vsel %vm472, %v760, 0
        %v767 = vsel %vm537, %v762, 0
        %769 = vmatprep.subr.bf16.mxu0 0
        %770 = vmatpush1.bf16.msra.mxu0 %v767
        %771 = vmatprep.subr.bf16.mxu0 0
        %772 = vmatpush1.bf16.msra.mxu0 0
        %773 = vmatprep.subr.bf16.mxu0 0
        %774 = vmatpush1.bf16.msra.mxu0 0
        %775 = vmatprep.subr.bf16.mxu0 0
        %776 = vmatpush1.bf16.msra.mxu0 0
        %777 = vmatprep.subr.bf16.mxu0 0
        %778 = vmatpush1.bf16.msra.mxu0 0
        %779 = vmatprep.subr.bf16.mxu0 0
        %780 = vmatpush1.bf16.msra.mxu0 0
        %781 = vmatprep.subr.bf16.mxu0 0
        %782 = vmatpush1.bf16.msra.mxu0 0
        %783 = vmatprep.subr.bf16.mxu0 0
        %784 = vmatpush1.bf16.msra.mxu0 0
        %785 = vmatprep.subr.bf16.mxu0 0
        %786 = vmatpush1.bf16.msra.mxu0 0
        %787 = vmatprep.subr.bf16.mxu0 0
        %788 = vmatpush1.bf16.msra.mxu0 0
        %789 = vmatprep.subr.bf16.mxu0 0
        %790 = vmatpush1.bf16.msra.mxu0 0
        %791 = vmatprep.subr.bf16.mxu0 0
        %792 = vmatpush1.bf16.msra.mxu0 0
        %793 = vmatprep.subr.bf16.mxu0 0
        %794 = vmatpush1.bf16.msra.mxu0 0
        %795 = vmatprep.subr.bf16.mxu0 0
        %796 = vmatpush1.bf16.msra.mxu0 0
        %797 = vmatprep.subr.bf16.mxu0 0
        %798 = vmatpush1.bf16.msra.mxu0 0
        %799 = vmatprep.subr.bf16.mxu0 0
        %800 = vmatpush1.bf16.msra.mxu0 0
        %801 = vmatprep.mubr.bf16.mxu0 0
        %802 = vmatmul.mubr.bf16.gmra.mrb[0].mxu0 %v764
        %v803 = vpop.f32.mrb[0].mxu0
        %v804 = vadd.f32 0.0, %v803
        %v805 = vpop.f32.mrb[0].mxu0
        %v806 = vpop.f32.mrb[0].mxu0
        %v807 = vpop.f32.mrb[0].mxu0
        %808 = vdwg.mxu0
        %810 = vrot.lane.b32.xlu0 %v804, 16
        %v811 = vpop.permute.xlu0 %810
        %vm813 = vcmask 195712
        %814 = vst.msk [vmem:[#allocation2] sm:$0xff] %vm813, %v811
        %815 = vrot.lane.b32.xlu0 %v470, 104
        %v816 = vpop.permute.xlu0 %815
        %817 = vrot.lane.b32.xlu0 %v471, 104
        %v818 = vpop.permute.xlu0 %817
        %v820 = vsel %vm472, %v816, 0
        %v823 = vsel %vm472, %v818, 0
        %825 = vmatprep.subr.bf16.mxu0 0
        %826 = vmatpush1.bf16.xpose.msra.mxu0 %v823
        %827 = vmatprep.subr.bf16.mxu0 0
        %828 = vmatpush1.bf16.xpose.msra.mxu0 0
        %829 = vmatprep.subr.bf16.mxu0 0
        %830 = vmatpush1.bf16.xpose.msra.mxu0 0
        %831 = vmatprep.subr.bf16.mxu0 0
        %832 = vmatpush1.bf16.xpose.msra.mxu0 0
        %833 = vmatprep.subr.bf16.mxu0 0
        %834 = vmatpush1.bf16.xpose.msra.mxu0 0
        %835 = vmatprep.subr.bf16.mxu0 0
        %836 = vmatpush1.bf16.xpose.msra.mxu0 0
        %837 = vmatprep.subr.bf16.mxu0 0
        %838 = vmatpush1.bf16.xpose.msra.mxu0 0
        %839 = vmatprep.subr.bf16.mxu0 0
        %840 = vmatpush1.bf16.xpose.msra.mxu0 0
        %841 = vmatprep.subr.bf16.mxu0 0
        %842 = vmatpush1.bf16.xpose.msra.mxu0 0
        %843 = vmatprep.subr.bf16.mxu0 0
        %844 = vmatpush1.bf16.xpose.msra.mxu0 0
        %845 = vmatprep.subr.bf16.mxu0 0
        %846 = vmatpush1.bf16.xpose.msra.mxu0 0
        %847 = vmatprep.subr.bf16.mxu0 0
        %848 = vmatpush1.bf16.xpose.msra.mxu0 0
        %849 = vmatprep.subr.bf16.mxu0 0
        %850 = vmatpush1.bf16.xpose.msra.mxu0 0
        %851 = vmatprep.subr.bf16.mxu0 0
        %852 = vmatpush1.bf16.xpose.msra.mxu0 0
        %853 = vmatprep.subr.bf16.mxu0 0
        %854 = vmatpush1.bf16.xpose.msra.mxu0 0
        %855 = vmatprep.subr.bf16.mxu0 0
        %856 = vmatpush1.bf16.xpose.msra.mxu0 0
        %857 = vmatprep.mubr.bf16.mxu0 0
        %858 = vmatmul.mubr.bf16.gmra.mrb[0].mxu0 %v820
        %v859 = vpop.f32.mrb[0].mxu0
        %v860 = vadd.f32 0.0, %v859
        %v861 = vpop.f32.mrb[0].mxu0
        %v862 = vpop.f32.mrb[0].mxu0
        %v863 = vpop.f32.mrb[0].mxu0
        %864 = vdwg.mxu0
        %v865 = vsel %vm472, %v860, -inf
        %866 = vmax.xlane.f32.xlu0 %v865
        %v867 = vpop.xlane.xlu0 %866
        %v868 = vsub.f32 %v860, %v867
        %v869 = vmul.f32 %v868, 1.442695
        %v870 = vpow.pop %v869
        %v871 = vsel %vm472, %v870, 0.0
        %872 = vadd.xlane.f32.xlu0 %v871
        %v873 = vpop.xlane.xlu0 %872
        %v874 = vrcp.pop %v873
        %v875 = vmul.f32 %v870, %v874
        %v876 = vpack.c.bf16 %v875, %v875
        %877 = vrot.lane.b32.xlu0 %v471, 72
        %v878 = vpop.permute.xlu0 %877
        %v880 = vsel %vm472, %v876, 0
        %v883 = vsel %vm537, %v878, 0
        %885 = vmatprep.subr.bf16.mxu0 0
        %886 = vmatpush1.bf16.msra.mxu0 %v883
        %887 = vmatprep.subr.bf16.mxu0 0
        %888 = vmatpush1.bf16.msra.mxu0 0
        %889 = vmatprep.subr.bf16.mxu0 0
        %890 = vmatpush1.bf16.msra.mxu0 0
        %891 = vmatprep.subr.bf16.mxu0 0
        %892 = vmatpush1.bf16.msra.mxu0 0
        %893 = vmatprep.subr.bf16.mxu0 0
        %894 = vmatpush1.bf16.msra.mxu0 0
        %895 = vmatprep.subr.bf16.mxu0 0
        %896 = vmatpush1.bf16.msra.mxu0 0
        %897 = vmatprep.subr.bf16.mxu0 0
        %898 = vmatpush1.bf16.msra.mxu0 0
        %899 = vmatprep.subr.bf16.mxu0 0
        %900 = vmatpush1.bf16.msra.mxu0 0
        %901 = vmatprep.subr.bf16.mxu0 0
        %902 = vmatpush1.bf16.msra.mxu0 0
        %903 = vmatprep.subr.bf16.mxu0 0
        %904 = vmatpush1.bf16.msra.mxu0 0
        %905 = vmatprep.subr.bf16.mxu0 0
        %906 = vmatpush1.bf16.msra.mxu0 0
        %907 = vmatprep.subr.bf16.mxu0 0
        %908 = vmatpush1.bf16.msra.mxu0 0
        %909 = vmatprep.subr.bf16.mxu0 0
        %910 = vmatpush1.bf16.msra.mxu0 0
        %911 = vmatprep.subr.bf16.mxu0 0
        %912 = vmatpush1.bf16.msra.mxu0 0
        %913 = vmatprep.subr.bf16.mxu0 0
        %914 = vmatpush1.bf16.msra.mxu0 0
        %915 = vmatprep.subr.bf16.mxu0 0
        %916 = vmatpush1.bf16.msra.mxu0 0
        %917 = vmatprep.mubr.bf16.mxu0 0
        %918 = vmatmul.mubr.bf16.gmra.mrb[0].mxu0 %v880
        %v919 = vpop.f32.mrb[0].mxu0
        %v920 = vadd.f32 0.0, %v919
        %v921 = vpop.f32.mrb[0].mxu0
        %v922 = vpop.f32.mrb[0].mxu0
        %v923 = vpop.f32.mrb[0].mxu0
        %924 = vdwg.mxu0
        %926 = vrot.lane.b32.xlu0 %v920, 24
        %v927 = vpop.permute.xlu0 %926
        %vm929 = vcmask 261312
        %930 = vst.msk [vmem:[#allocation2] sm:$0xff] %vm929, %v927
        %v931 = vld [vmem:[#allocation2] sm:$0xff]
        %v932 = vpack.c.bf16 %v931, %v931
        %v933 = vld [vmem:[%s5] sm:$0xf]
        %v934 = vld [vmem:[%s5 + $0x4] sm:$0xf]
        %v935 = vld [vmem:[%s5 + $0x8] sm:$0xf]
        %v936 = vld [vmem:[%s5 + $0xc] sm:$0xf]
        %v937 = vld [vmem:[%s6] sm:$0x1]
        %v939 = vlaneseq
        %v940 = vshrl.u32 %v939, 7
        %v941 = vsub.s32 0, %v940
        %v942 = vrot.slane %v937, %v941
        %v948 = vunpack.c.l.b16 %v933
        %v949 = vunpack.c.l.b16 %v934
        %v950 = vunpack.c.l.b16 %v935
        %v951 = vunpack.c.l.b16 %v936
        %v952 = vpack.c.b16 %v949, %v948
        %v953 = vpack.c.b16 %v951, %v950
        %v957 = vsel %vm363, %v932, 0
        %959 = vmatprep.subr.bf16.mxu0 0
        %960 = vmatpush1.bf16.msra.mxu0 %v952
        %961 = vmatprep.subr.bf16.mxu0 0
        %962 = vmatpush1.bf16.msra.mxu0 %v953
        %963 = vmatprep.subr.bf16.mxu0 0
        %964 = vmatpush1.bf16.msra.mxu0 0
        %965 = vmatprep.subr.bf16.mxu0 0
        %966 = vmatpush1.bf16.msra.mxu0 0
        %967 = vmatprep.subr.bf16.mxu0 0
        %968 = vmatpush1.bf16.msra.mxu0 0
        %969 = vmatprep.subr.bf16.mxu0 0
        %970 = vmatpush1.bf16.msra.mxu0 0
        %971 = vmatprep.subr.bf16.mxu0 0
        %972 = vmatpush1.bf16.msra.mxu0 0
        %973 = vmatprep.subr.bf16.mxu0 0
        %974 = vmatpush1.bf16.msra.mxu0 0
        %975 = vmatprep.subr.bf16.mxu0 0
        %976 = vmatpush1.bf16.msra.mxu0 0
        %977 = vmatprep.subr.bf16.mxu0 0
        %978 = vmatpush1.bf16.msra.mxu0 0
        %979 = vmatprep.subr.bf16.mxu0 0
        %980 = vmatpush1.bf16.msra.mxu0 0
        %981 = vmatprep.subr.bf16.mxu0 0
        %982 = vmatpush1.bf16.msra.mxu0 0
        %983 = vmatprep.subr.bf16.mxu0 0
        %984 = vmatpush1.bf16.msra.mxu0 0
        %985 = vmatprep.subr.bf16.mxu0 0
        %986 = vmatpush1.bf16.msra.mxu0 0
        %987 = vmatprep.subr.bf16.mxu0 0
        %988 = vmatpush1.bf16.msra.mxu0 0
        %989 = vmatprep.subr.bf16.mxu0 0
        %990 = vmatpush1.bf16.msra.mxu0 0
        %991 = vmatprep.mubr.bf16.mxu0 0
        %992 = vmatmul.mubr.bf16.gmra.mrb[0].mxu0 %v957
        %v993 = vpop.f32.mrb[0].mxu0
        %v994 = vadd.f32 %v942, %v993
        %v995 = vpop.f32.mrb[0].mxu0
        %v996 = vpop.f32.mrb[0].mxu0
        %v997 = vpop.f32.mrb[0].mxu0
        %998 = vdwg.mxu0
        %999 = vst.msk [vmem:[%s336] sm:$0xff] %vm363, %v994
        %s1000 = sand.u32 %s199, 1
        %s1001 = scalar_lea.sflag [#allocation5], %s1000
        %s1002 = sand.u32 %s199, 1
        %s1003 = smul.addr %s1002, 8
        %s1004 = scalar_lea.vmem [#allocation9], %s1003
        // Predicated region
        $region61: #{tpu_custom_call.1} parent=47 // pred_check
          %p1005 = pneg %p209
        $region62: #{tpu_custom_call.1} parent=47 // pred_check_branch
          %1007 = sbr.rel (%p1005) target = $region64
        $region63: #{tpu_custom_call.1} parent=47 // pred_region
          %s1009 = ssub.s32 128, 128
          %1010 = vsyncadd %s1001, %s1009
          %s1011 = sadd.s32 %s30, %s29
          %s1012 = smul.addr %s1011, 128
          %s1013 = scalar_lea.hbm %s7, %s1012
          %s1015 = sshll.u32 %s1004, 4
          %s1016 = int_to_ptr.vmem [resolvable:$true] %s1015
          %1018 = dma.vmem_to_hbm [thread:$0]  %s1016, 128, %s1013, %s1001
        $region64: #{tpu_custom_call.1} parent=47 // pred_fallthru
          _
      $region48: #{tpu_custom_call.1} parent=5 // pred_fallthru
        _
      %p1019 = scmp.le.s32.totalorder 2, %s20
      // Predicated region
      $region65: #{tpu_custom_call.1} parent=5 // pred_check
        %p1020 = pneg %p1019
      $region66: #{tpu_custom_call.1} parent=5 // pred_check_branch
        %1022 = sbr.rel (%p1020) target = $region68
      $region67: #{tpu_custom_call.1} parent=5 // pred_region
        %s1023 = ssub.s32 %s20, 2
        // Predicated region
        $region69: #{tpu_custom_call.1} parent=67 // pred_check
          %p1024 = pneg %p215
        $region70: #{tpu_custom_call.1} parent=67 // pred_check_branch
          %1026 = sbr.rel (%p1024) target = $region72
        $region71: #{tpu_custom_call.1} parent=67 // pred_region
          %s1027 = sand.u32 %s200, 1
          %s1028 = scalar_lea.sflag [#allocation5], %s1027
          %s1029 = sand.u32 %s200, 1
          %s1030 = smul.addr %s1029, 8
          %s1031 = scalar_lea.vmem [#allocation9], %s1030
          %1032 = dma.done %s1028, 128
        $region72: #{tpu_custom_call.1} parent=67 // pred_fallthru
          _
      $region68: #{tpu_custom_call.1} parent=5 // pred_fallthru
        _
    $region6: #{tpu_custom_call.1} parent=1 // loop_footer
      %s24 = sadd.s32 1, %s20
    $region7: #{tpu_custom_call.1} parent=1 // loop_footer_branch
      %19 = sbr.rel target = $region3
    $region8: #{tpu_custom_call.1} parent=1 // loop_exit
      _
    %1033 = vsyncpa [#allocation4], 1
    %s1034 = scalar_lea.sflag [#allocation4], 1
    %1035 = vsyncpa %s1034, 1
    %1036 = vsyncpa [#allocation7], 1
    %1037 = vsyncpa [#allocation5], 1
    %s1038 = scalar_lea.sflag [#allocation5], 1
    %1039 = vsyncpa %s1038, 1

</llo_original>
